<compile_context>
chip_gen: v7x
topology: tpu7x:2x2x1
jax: 0.10.0
libtpu: 0.0.40
codegen_flags: <defaults>
</compile_context>

<pallas_src>
import functools

import jax
import jax.numpy as jnp
from jax import lax
from jax.experimental import pallas as pl
from jax.experimental.pallas import tpu as pltpu


def _cdiv(a: int, b: int) -> int:
    return -(-a // b)


def _round_up(x: int, m: int) -> int:
    return -(-x // m) * m


def _tpu_generation():
    """Best-effort TPU generation detection from device_kind."""
    try:
        kind = jax.devices()[0].device_kind.lower()
    except Exception:
        return None
    if "v5" in kind:
        return "v5e"
    if "v6" in kind:
        return "v6e"
    if "v7" in kind or "7x" in kind:
        return "v7x"
    return None


# (tm, tf, tk, vmem_cap_bytes) per generation.
_GEN_DEFAULTS = {
    "v5e": (512, 512, 512, 64 << 20),
    "v6e": (1536, 1536, 512, 100 << 20),
    "v7x": (1024, 1024, 512, 48 << 20),
    None: (512, 512, 512, 64 << 20),
}


def _balanced_tile(dim: int, max_tile: int, align: int) -> int:
    """Largest tile <= max_tile that balances blocks over `dim`, aligned."""
    max_tile = max(align, _round_up(max_tile, align))
    nblocks = _cdiv(dim, max_tile)
    return min(max_tile, _round_up(_cdiv(dim, nblocks), align))


def _sanbet_kernel(w_ref, b_ref, adj_ref, inp_ref, out_ref, acc_ref, *,
                   n_total, tk):
    """One (tm, tf) output tile, reducing over the k (== N) grid axis."""
    k = pl.program_id(2)
    nk = pl.num_programs(2)

    @pl.when(k == 0)
    def _init():
        acc_ref[...] = jnp.zeros_like(acc_ref)

    n_rem = n_total % tk  # static Python int (baked via functools.partial)

    if n_rem == 0:
        # Divisible reduction axis: raw adj @ inp straight onto the MXU.
        acc_ref[...] += jnp.dot(adj_ref[...], inp_ref[...],
                                preferred_element_type=jnp.float32)
    else:
        # Ragged reduction axis: only the final k block needs masking; the
        # out-of-bounds part of a partial block is unspecified and must not
        # contaminate the accumulation.
        @pl.when(k < nk - 1)
        def _full_block():
            acc_ref[...] += jnp.dot(adj_ref[...], inp_ref[...],
                                    preferred_element_type=jnp.float32)

        @pl.when(k == nk - 1)
        def _tail_block():
            a = adj_ref[...]
            x = inp_ref[...]
            col = lax.broadcasted_iota(jnp.int32, a.shape, 1)
            row = lax.broadcasted_iota(jnp.int32, x.shape, 0)
            a = jnp.where(col < n_rem, a, jnp.zeros_like(a))
            x = jnp.where(row < n_rem, x, jnp.zeros_like(x))
            acc_ref[...] += jnp.dot(a, x, preferred_element_type=jnp.float32)

    @pl.when(k == nk - 1)
    def _epilogue():
        # weight/bias hoisted out of the reduction: applied once per tile.
        out_ref[...] = (acc_ref[...] * w_ref[0] + b_ref[0]).astype(out_ref.dtype)


@functools.partial(jax.jit,
                   static_argnames=("use_bf16", "out_dtype", "tm", "tf", "tk"))
def sanbet_layer(inp, adj, weight, bias, *, use_bf16=True, out_dtype=None,
                 tm=None, tf=None, tk=None):
    """Pallas implementation of SANBet_Layer.forward.

    inp: (N, F), adj: (M, N), weight/bias: shape-(1,) scalars.
    Returns (M, F) = adj @ (inp * weight) + bias == weight * (adj @ inp) + bias.
    """
    N, F = inp.shape
    M, N2 = adj.shape
    assert N == N2, "adj columns must match inp rows"

    compute_dtype = jnp.bfloat16 if use_bf16 else inp.dtype
    out_dtype = jnp.dtype(out_dtype) if out_dtype is not None else inp.dtype

    gen = _tpu_generation()
    d_tm, d_tf, d_tk, vmem_cap = _GEN_DEFAULTS.get(gen, _GEN_DEFAULTS[None])
    tm = tm or d_tm
    tf = tf or d_tf
    tk = tk or d_tk

    # Second-to-last block dims aligned to 16 (bf16 sublane packing; a superset
    # of f32's 8), lane dims to 128, reduction tile to 256 (MXU depth).
    tm_eff = _balanced_tile(M, tm, 16)
    tf_eff = _balanced_tile(F, tf, 128)
    tk_eff = _balanced_tile(N, tk, 256)

    # v7x has 2 TensorCores sharded over the 'parallel' grid axes: make sure
    # there are at least 2 parallel tiles so one core is not idle.
    if gen == "v7x" and _cdiv(M, tm_eff) * _cdiv(F, tf_eff) < 2:
        if M > 16:
            tm_eff = _round_up(_cdiv(M, 2), 16)
        elif F > 128:
            tf_eff = _round_up(_cdiv(F, 2), 128)

    grid = (_cdiv(M, tm_eff), _cdiv(F, tf_eff), _cdiv(N, tk_eff))

    # Casts only (no padding, no extra copy when dtypes already match).
    adj_c = adj.astype(compute_dtype)
    inp_c = inp.astype(compute_dtype)
    w = jnp.asarray(weight, jnp.float32).reshape((1,))
    b = jnp.asarray(bias, jnp.float32).reshape((1,))

    in_b = jnp.dtype(compute_dtype).itemsize
    out_b = jnp.dtype(out_dtype).itemsize

    # VMEM budget: double-buffered operand/out tiles + resident f32 accumulator
    # + headroom, capped per generation (v7x cap leaves Mosaic scratch room).
    est = (2 * (tm_eff * tk_eff + tk_eff * tf_eff) * in_b
           + 2 * tm_eff * tf_eff * out_b
           + tm_eff * tf_eff * 4)
    vmem_limit = int(min(max(est + (8 << 20), 32 << 20), vmem_cap))

    cost = pl.CostEstimate(
        flops=2 * M * N * F,
        bytes_accessed=(M * N + N * F) * in_b + M * F * out_b,
        transcendentals=0,
    )

    kernel = functools.partial(_sanbet_kernel, n_total=N, tk=tk_eff)

    grid_spec = pltpu.PrefetchScalarGridSpec(
        num_scalar_prefetch=2,  # weight, bias land in SMEM
        grid=grid,
        in_specs=[
            # adj tile: rows follow i, reduction dim follows k
            pl.BlockSpec((tm_eff, tk_eff), lambda i, j, k, w_r, b_r: (i, k)),
            # inp tile: reduction dim follows k, feature dim follows j
            pl.BlockSpec((tk_eff, tf_eff), lambda i, j, k, w_r, b_r: (k, j)),
        ],
        out_specs=pl.BlockSpec((tm_eff, tf_eff), lambda i, j, k, w_r, b_r: (i, j)),
        scratch_shapes=[pltpu.VMEM((tm_eff, tf_eff), jnp.float32)],
    )

    # TODO(synk): v6e with exposed DMA could try pipeline_mode=pl.Buffered(3)
    # on the operand BlockSpecs; v7x could store adj as fp8 (0/1 exact) if adj
    # HBM traffic dominates — both need a profile before committing.
    return pl.pallas_call(
        kernel,
        out_shape=jax.ShapeDtypeStruct((M, F), out_dtype),
        grid_spec=grid_spec,
        compiler_params=pltpu.CompilerParams(
            dimension_semantics=("parallel", "parallel", "arbitrary"),
            vmem_limit_bytes=vmem_limit,
        ),
        cost_estimate=cost,
    )(w, b, adj_c, inp_c)


if __name__ == "__main__":
    key = jax.random.PRNGKey(0)
    k_inp, k_adj, k_inp2, k_adj2 = jax.random.split(key, 4)

    # Module __init__ gives weight=zeros(1), bias=ones(1); non-trivial weight
    # used here so the matmul path is exercised.
    weight = jnp.array([0.5], dtype=jnp.float32)
    bias = jnp.array([1.0], dtype=jnp.float32)

    # ---- Test 1: non-tile-aligned M/N/F, single K block (tail mask active) --
    M, N, F = 200, 192, 320
    inp = jax.random.normal(k_inp, (N, F), dtype=jnp.float32)
    adj = (jax.random.uniform(k_adj, (M, N)) < 0.1).astype(jnp.float32)

    ref_f32 = adj @ (inp * weight[0]) + bias[0]
    ref_bf16 = (jnp.dot(adj.astype(jnp.bfloat16), inp.astype(jnp.bfloat16),
                        preferred_element_type=jnp.float32) * weight[0]
                + bias[0])

    # f32 operand path: matches the plain-JAX f32 reference tightly.
    out_f32 = jax.block_until_ready(
        sanbet_layer(inp, adj, weight, bias, use_bf16=False))
    assert out_f32.shape == (M, F)
    assert jnp.allclose(out_f32, ref_f32, atol=1e-4, rtol=1e-4), \
        "f32 mismatch vs reference"

    # Default (bf16 operand) path: matches the bf16 reference tightly and the
    # f32 reference loosely (adj cast is exact, only inp loses precision).
    out = jax.block_until_ready(sanbet_layer(inp, adj, weight, bias))
    assert jnp.allclose(out, ref_bf16, atol=1e-3, rtol=1e-3), \
        "bf16 mismatch vs bf16 reference"
    assert jnp.allclose(out, ref_f32, atol=1e-1, rtol=5e-2), \
        "bf16 drifted too far from f32 reference"

    # ---- Test 2: multi-block K reduction with a ragged K tail ---------------
    M2, N2, F2 = 136, 700, 256
    inp2 = jax.random.normal(k_inp2, (N2, F2), dtype=jnp.float32)
    adj2 = (jax.random.uniform(k_adj2, (M2, N2)) < 0.1).astype(jnp.float32)

    ref2_bf16 = (jnp.dot(adj2.astype(jnp.bfloat16), inp2.astype(jnp.bfloat16),
                         preferred_element_type=jnp.float32) * weight[0]
                 + bias[0])
    out2 = jax.block_until_ready(sanbet_layer(inp2, adj2, weight, bias))
    assert out2.shape == (M2, F2)
    assert jnp.allclose(out2, ref2_bf16, atol=1e-3, rtol=1e-3), \
        "multi-K bf16 mismatch vs bf16 reference"

    # TODO(synk): torch.spmm takes a sparse adj; production block-sparse adj
    # could prefetch a per-(i,k) nonzero mask and skip empty tiles via pl.when.

    print("KERNEL_OK")
</pallas_src>

<mosaic_0001>
module attributes {stable_mosaic.version = 11 : i64} {
  func.func @_sanbet_kernel(%arg0: i32, %arg1: i32, %arg2: i32, %arg3: memref<1xf32, #tpu.memory_space<smem>>, %arg4: memref<1xf32, #tpu.memory_space<smem>>, %arg5: memref<208x256xf32, #tpu.memory_space<vmem>>, %arg6: memref<256x384xf32, #tpu.memory_space<vmem>>, %arg7: memref<208x384xf32, #tpu.memory_space<vmem>>, %arg8: memref<208x384xf32, #tpu.memory_space<vmem>>) attributes {dimension_semantics = [#tpu.dimension_semantics<parallel>, #tpu.dimension_semantics<parallel>, #tpu.dimension_semantics<arbitrary>], iteration_bounds = array<i64: 1, 1, 1>, scalar_prefetch = 2 : i64, scratch_operands = 1 : i64, tpu.core_type = #tpu.core_type<tc>, window_params = [{transform_indices = @transform_0, window_bounds = array<i64: 208, 256>}, {transform_indices = @transform_1, window_bounds = array<i64: 256, 384>}, {transform_indices = @transform_2, window_bounds = array<i64: 208, 384>}]} {
    %c0_i32 = arith.constant 0 : i32
    %0 = arith.cmpi eq, %arg2, %c0_i32 : i32
    %1 = arith.extui %0 : i1 to i32
    %c0_i32_0 = arith.constant 0 : i32
    %2 = arith.cmpi ne, %1, %c0_i32_0 : i32
    scf.if %2 {
      %cst = arith.constant 0.000000e+00 : f32
      %12 = vector.broadcast %cst : f32 to vector<208x384xf32>
      %c0 = arith.constant 0 : index
      %c0_7 = arith.constant 0 : index
      %13 = vector.load %arg8[%c0, %c0_7] : memref<208x384xf32, #tpu.memory_space<vmem>>, vector<208x384xf32>
      tpu.vector_store %arg8[%c0, %c0_7], %12 {strides = array<i32>} : memref<208x384xf32, #tpu.memory_space<vmem>>, vector<208x384xf32>,
    } else {
    }
    %c0_i32_1 = arith.constant 0 : i32
    %3 = arith.cmpi slt, %arg2, %c0_i32_1 : i32
    %4 = arith.extui %3 : i1 to i32
    %c0_i32_2 = arith.constant 0 : i32
    %5 = arith.cmpi ne, %4, %c0_i32_2 : i32
    scf.if %5 {
      %c0 = arith.constant 0 : index
      %c0_7 = arith.constant 0 : index
      %12 = vector.load %arg8[%c0, %c0_7] : memref<208x384xf32, #tpu.memory_space<vmem>>, vector<208x384xf32>
      %c0_8 = arith.constant 0 : index
      %c0_9 = arith.constant 0 : index
      %13 = vector.load %arg5[%c0_8, %c0_9] : memref<208x256xf32, #tpu.memory_space<vmem>>, vector<208x256xf32>
      %c0_10 = arith.constant 0 : index
      %c0_11 = arith.constant 0 : index
      %14 = vector.load %arg6[%c0_10, %c0_11] : memref<256x384xf32, #tpu.memory_space<vmem>>, vector<256x384xf32>
      %cst = arith.constant dense<0.000000e+00> : vector<208x384xf32>
      %15 = tpu.matmul %13, %14, %cst {dimension_numbers = #tpu.dot_dimension_numbers<[1], [0], [0], [1], [0, 0, 1, 1], [], []>} : vector<208x256xf32>, vector<256x384xf32>, vector<208x384xf32> -> vector<208x384xf32>
      %16 = arith.addf %12, %15 : vector<208x384xf32>
      %c0_12 = arith.constant 0 : index
      %c0_13 = arith.constant 0 : index
      %17 = vector.load %arg8[%c0_12, %c0_13] : memref<208x384xf32, #tpu.memory_space<vmem>>, vector<208x384xf32>
      tpu.vector_store %arg8[%c0_12, %c0_13], %16 {strides = array<i32>} : memref<208x384xf32, #tpu.memory_space<vmem>>, vector<208x384xf32>,
    } else {
    }
    %c0_i32_3 = arith.constant 0 : i32
    %6 = arith.cmpi eq, %arg2, %c0_i32_3 : i32
    %7 = arith.extui %6 : i1 to i32
    %c0_i32_4 = arith.constant 0 : i32
    %8 = arith.cmpi ne, %7, %c0_i32_4 : i32
    scf.if %8 {
      %c0 = arith.constant 0 : index
      %c0_7 = arith.constant 0 : index
      %12 = vector.load %arg5[%c0, %c0_7] : memref<208x256xf32, #tpu.memory_space<vmem>>, vector<208x256xf32>
      %c0_8 = arith.constant 0 : index
      %c0_9 = arith.constant 0 : index
      %13 = vector.load %arg6[%c0_8, %c0_9] : memref<256x384xf32, #tpu.memory_space<vmem>>, vector<256x384xf32>
      %14 = tpu.iota {dimensions = array<i32: 1>} : vector<208x256xi32>
      %15 = tpu.iota {dimensions = array<i32: 0>} : vector<256x384xi32>
      %c192_i32 = arith.constant 192 : i32
      %16 = vector.broadcast %c192_i32 : i32 to vector<208x256xi32>
      %17 = arith.cmpi slt, %14, %16 : vector<208x256xi32>
      %cst = arith.constant 0.000000e+00 : f32
      %18 = vector.broadcast %cst : f32 to vector<208x256xf32>
      %19 = arith.select %17, %12, %18 : vector<208x256xi1>, vector<208x256xf32>
      %c192_i32_10 = arith.constant 192 : i32
      %20 = vector.broadcast %c192_i32_10 : i32 to vector<256x384xi32>
      %21 = arith.cmpi slt, %15, %20 : vector<256x384xi32>
      %cst_11 = arith.constant 0.000000e+00 : f32
      %22 = vector.broadcast %cst_11 : f32 to vector<256x384xf32>
      %23 = arith.select %21, %13, %22 : vector<256x384xi1>, vector<256x384xf32>
      %c0_12 = arith.constant 0 : index
      %c0_13 = arith.constant 0 : index
      %24 = vector.load %arg8[%c0_12, %c0_13] : memref<208x384xf32, #tpu.memory_space<vmem>>, vector<208x384xf32>
      %cst_14 = arith.constant dense<0.000000e+00> : vector<208x384xf32>
      %25 = tpu.matmul %19, %23, %cst_14 {dimension_numbers = #tpu.dot_dimension_numbers<[1], [0], [0], [1], [0, 0, 1, 1], [], []>} : vector<208x256xf32>, vector<256x384xf32>, vector<208x384xf32> -> vector<208x384xf32>
      %26 = arith.addf %24, %25 : vector<208x384xf32>
      %c0_15 = arith.constant 0 : index
      %c0_16 = arith.constant 0 : index
      %27 = vector.load %arg8[%c0_15, %c0_16] : memref<208x384xf32, #tpu.memory_space<vmem>>, vector<208x384xf32>
      tpu.vector_store %arg8[%c0_15, %c0_16], %26 {strides = array<i32>} : memref<208x384xf32, #tpu.memory_space<vmem>>, vector<208x384xf32>,
    } else {
    }
    %c0_i32_5 = arith.constant 0 : i32
    %9 = arith.cmpi eq, %arg2, %c0_i32_5 : i32
    %10 = arith.extui %9 : i1 to i32
    %c0_i32_6 = arith.constant 0 : i32
    %11 = arith.cmpi ne, %10, %c0_i32_6 : i32
    scf.if %11 {
      %c0 = arith.constant 0 : index
      %c0_7 = arith.constant 0 : index
      %12 = vector.load %arg8[%c0, %c0_7] : memref<208x384xf32, #tpu.memory_space<vmem>>, vector<208x384xf32>
      %c0_8 = arith.constant 0 : index
      %13 = memref.load %arg3[%c0_8] : memref<1xf32, #tpu.memory_space<smem>>
      %14 = vector.broadcast %13 : f32 to vector<208x384xf32>
      %15 = arith.mulf %12, %14 : vector<208x384xf32>
      %c0_9 = arith.constant 0 : index
      %16 = memref.load %arg4[%c0_9] : memref<1xf32, #tpu.memory_space<smem>>
      %17 = vector.broadcast %16 : f32 to vector<208x384xf32>
      %18 = arith.addf %15, %17 : vector<208x384xf32>
      %c0_10 = arith.constant 0 : index
      %c0_11 = arith.constant 0 : index
      %19 = vector.load %arg7[%c0_10, %c0_11] : memref<208x384xf32, #tpu.memory_space<vmem>>, vector<208x384xf32>
      tpu.vector_store %arg7[%c0_10, %c0_11], %18 {strides = array<i32>} : memref<208x384xf32, #tpu.memory_space<vmem>>, vector<208x384xf32>,
    } else {
    }
    return
  }
  func.func @transform_0(%arg0: i32, %arg1: i32, %arg2: i32, %arg3: memref<1xf32, #tpu.memory_space<smem>>, %arg4: memref<1xf32, #tpu.memory_space<smem>>) -> (i32, i32) {
    %c0_i32 = arith.constant 0 : i32
    return %arg0, %arg2 : i32, i32
  }
  func.func @transform_1(%arg0: i32, %arg1: i32, %arg2: i32, %arg3: memref<1xf32, #tpu.memory_space<smem>>, %arg4: memref<1xf32, #tpu.memory_space<smem>>) -> (i32, i32) {
    %c0_i32 = arith.constant 0 : i32
    return %arg2, %arg1 : i32, i32
  }
  func.func @transform_2(%arg0: i32, %arg1: i32, %arg2: i32, %arg3: memref<1xf32, #tpu.memory_space<smem>>, %arg4: memref<1xf32, #tpu.memory_space<smem>>) -> (i32, i32) {
    %c0_i32 = arith.constant 0 : i32
    return %arg0, %arg1 : i32, i32
  }
}

</mosaic_0001>

<llo_original>
// kernel: sanbet_layer.1
$region0: #{sanbet_layer.1}
  #allocation0 [shape = 'u32[]', space=smem, size = 0x4, offset = 0x4, fixed_abs, tag = 'smem constant byte address 0x4 - core index']
  #allocation1 [shape = 'u32[144,128]{1,0:T(1,128)}', space=vmem, size = 0x12000, scoped, tag = 'internal scratch']
  #allocation2 [shape = 'f32[208,384]{1,0:T(8,128)}', space=vmem, size = 0x4e000, scoped, tag = 'scratch operand']
  #allocation3 [shape = 's32[1]{0}', space=sflag, size = 0x4, scoped, tag = 'scoped memory for sanbet_layer.1']
  #allocation4 [shape = 'f32[1]{0:T(128)S(6)}', space=smem, size = 0x200, scoped, tag = 'prefetched SMEM operand 0']
  #allocation5 [shape = 'f32[1]{0:T(128)S(6)}', space=smem, size = 0x200, scoped, tag = 'prefetched SMEM operand 1']
  %s0 = inlined_call_operand.<no memory space> [shape: f32[1], index: 0, kind: input, shape index: {}]
  %s1 = inlined_call_operand.<no memory space> [shape: f32[1], index: 1, kind: input, shape index: {}]
  %s2 = inlined_call_operand.vmem [shape: f32[200,192], index: 2, kind: input, shape index: {}]
  %s3 = inlined_call_operand.vmem [shape: f32[192,320], index: 3, kind: input, shape index: {}]
  %s4 = inlined_call_operand.hbm [shape: f32[200,320], index: 4, kind: output, shape index: {}]
  %s5 = sld [smem:[#allocation0]]
  $region30: #{sanbet_layer.1} parent=0
    _
  %s7 = ssub.s32 1, %s5
  %s8 = scalar_select 0, %s7, %s5
  %9 = sst [smem:[#allocation4]] %s0
  %10 = sst [smem:[#allocation5]] %s1
  $region1: #{sanbet_layer.1} parent=0
    #allocation6 [shape = 'u8[319488]{0}', space=vmem, size = 0x4e000, scoped, tag = 'output window, operand 0, single buffered']
    #allocation7 [shape = 's32[1]{0}', space=sflag, size = 0x4, scoped, tag = 'scoped memory for sanbet_layer.1']
    %11 = vsyncpa [#allocation7], 0
    // Predicated region
    $region2: #{sanbet_layer.1} parent=1 // pred_check
      _
    $region3: #{sanbet_layer.1} parent=1 // pred_check_branch
      %13 = sbr.rel (0) target = $region5
    $region4: #{sanbet_layer.1} parent=1 // pred_region
      _
    $region5: #{sanbet_layer.1} parent=1 // pred_fallthru
      _
    // Predicated region
    $region6: #{sanbet_layer.1} parent=1 // pred_check
      _
    $region7: #{sanbet_layer.1} parent=1 // pred_check_branch
      %15 = sbr.rel (0) target = $region9
    $region8: #{sanbet_layer.1} parent=1 // pred_region
      _
    $region9: #{sanbet_layer.1} parent=1 // pred_fallthru
      _
    %p16 = scmp.eq.s32.totalorder 0, 0
    // Predicated region
    $region10: #{sanbet_layer.1} parent=1 // pred_check
      %p17 = pneg %p16
    $region11: #{sanbet_layer.1} parent=1 // pred_check_branch
      %19 = sbr.rel (%p17) target = $region13
    $region12: #{sanbet_layer.1} parent=1 // pred_region
      %20 = vst [vmem:[#allocation2] sm:$0xff] 0.0
      %21 = vst [vmem:[#allocation2 + $0x8] sm:$0xff] 0.0
      %22 = vst [vmem:[#allocation2 + $0x10] sm:$0xff] 0.0
      %23 = vst [vmem:[#allocation2 + $0x18] sm:$0xff] 0.0
      %24 = vst [vmem:[#allocation2 + $0x20] sm:$0xff] 0.0
      %25 = vst [vmem:[#allocation2 + $0x28] sm:$0xff] 0.0
      %26 = vst [vmem:[#allocation2 + $0x30] sm:$0xff] 0.0
      %27 = vst [vmem:[#allocation2 + $0x38] sm:$0xff] 0.0
      %28 = vst [vmem:[#allocation2 + $0x40] sm:$0xff] 0.0
      %29 = vst [vmem:[#allocation2 + $0x48] sm:$0xff] 0.0
      %30 = vst [vmem:[#allocation2 + $0x50] sm:$0xff] 0.0
      %31 = vst [vmem:[#allocation2 + $0x58] sm:$0xff] 0.0
      %32 = vst [vmem:[#allocation2 + $0x60] sm:$0xff] 0.0
      %33 = vst [vmem:[#allocation2 + $0x68] sm:$0xff] 0.0
      %34 = vst [vmem:[#allocation2 + $0x70] sm:$0xff] 0.0
      %35 = vst [vmem:[#allocation2 + $0x78] sm:$0xff] 0.0
      %36 = vst [vmem:[#allocation2 + $0x80] sm:$0xff] 0.0
      %37 = vst [vmem:[#allocation2 + $0x88] sm:$0xff] 0.0
      %38 = vst [vmem:[#allocation2 + $0x90] sm:$0xff] 0.0
      %39 = vst [vmem:[#allocation2 + $0x98] sm:$0xff] 0.0
      %40 = vst [vmem:[#allocation2 + $0xa0] sm:$0xff] 0.0
      %41 = vst [vmem:[#allocation2 + $0xa8] sm:$0xff] 0.0
      %42 = vst [vmem:[#allocation2 + $0xb0] sm:$0xff] 0.0
      %43 = vst [vmem:[#allocation2 + $0xb8] sm:$0xff] 0.0
      %44 = vst [vmem:[#allocation2 + $0xc0] sm:$0xff] 0.0
      %45 = vst [vmem:[#allocation2 + $0xc8] sm:$0xff] 0.0
      %46 = vst [vmem:[#allocation2 + $0xd0] sm:$0xff] 0.0
      %47 = vst [vmem:[#allocation2 + $0xd8] sm:$0xff] 0.0
      %48 = vst [vmem:[#allocation2 + $0xe0] sm:$0xff] 0.0
      %49 = vst [vmem:[#allocation2 + $0xe8] sm:$0xff] 0.0
      %50 = vst [vmem:[#allocation2 + $0xf0] sm:$0xff] 0.0
      %51 = vst [vmem:[#allocation2 + $0xf8] sm:$0xff] 0.0
      %52 = vst [vmem:[#allocation2 + $0x100] sm:$0xff] 0.0
      %53 = vst [vmem:[#allocation2 + $0x108] sm:$0xff] 0.0
      %54 = vst [vmem:[#allocation2 + $0x110] sm:$0xff] 0.0
      %55 = vst [vmem:[#allocation2 + $0x118] sm:$0xff] 0.0
      %56 = vst [vmem:[#allocation2 + $0x120] sm:$0xff] 0.0
      %57 = vst [vmem:[#allocation2 + $0x128] sm:$0xff] 0.0
      %58 = vst [vmem:[#allocation2 + $0x130] sm:$0xff] 0.0
      %59 = vst [vmem:[#allocation2 + $0x138] sm:$0xff] 0.0
      %60 = vst [vmem:[#allocation2 + $0x140] sm:$0xff] 0.0
      %61 = vst [vmem:[#allocation2 + $0x148] sm:$0xff] 0.0
      %62 = vst [vmem:[#allocation2 + $0x150] sm:$0xff] 0.0
      %63 = vst [vmem:[#allocation2 + $0x158] sm:$0xff] 0.0
      %64 = vst [vmem:[#allocation2 + $0x160] sm:$0xff] 0.0
      %65 = vst [vmem:[#allocation2 + $0x168] sm:$0xff] 0.0
      %66 = vst [vmem:[#allocation2 + $0x170] sm:$0xff] 0.0
      %67 = vst [vmem:[#allocation2 + $0x178] sm:$0xff] 0.0
      %68 = vst [vmem:[#allocation2 + $0x180] sm:$0xff] 0.0
      %69 = vst [vmem:[#allocation2 + $0x188] sm:$0xff] 0.0
      %70 = vst [vmem:[#allocation2 + $0x190] sm:$0xff] 0.0
      %71 = vst [vmem:[#allocation2 + $0x198] sm:$0xff] 0.0
      %72 = vst [vmem:[#allocation2 + $0x1a0] sm:$0xff] 0.0
      %73 = vst [vmem:[#allocation2 + $0x1a8] sm:$0xff] 0.0
      %74 = vst [vmem:[#allocation2 + $0x1b0] sm:$0xff] 0.0
      %75 = vst [vmem:[#allocation2 + $0x1b8] sm:$0xff] 0.0
      %76 = vst [vmem:[#allocation2 + $0x1c0] sm:$0xff] 0.0
      %77 = vst [vmem:[#allocation2 + $0x1c8] sm:$0xff] 0.0
      %78 = vst [vmem:[#allocation2 + $0x1d0] sm:$0xff] 0.0
      %79 = vst [vmem:[#allocation2 + $0x1d8] sm:$0xff] 0.0
      %80 = vst [vmem:[#allocation2 + $0x1e0] sm:$0xff] 0.0
      %81 = vst [vmem:[#allocation2 + $0x1e8] sm:$0xff] 0.0
      %82 = vst [vmem:[#allocation2 + $0x1f0] sm:$0xff] 0.0
      %83 = vst [vmem:[#allocation2 + $0x1f8] sm:$0xff] 0.0
      %84 = vst [vmem:[#allocation2 + $0x200] sm:$0xff] 0.0
      %85 = vst [vmem:[#allocation2 + $0x208] sm:$0xff] 0.0
      %86 = vst [vmem:[#allocation2 + $0x210] sm:$0xff] 0.0
      %87 = vst [vmem:[#allocation2 + $0x218] sm:$0xff] 0.0
      %88 = vst [vmem:[#allocation2 + $0x220] sm:$0xff] 0.0
      %89 = vst [vmem:[#allocation2 + $0x228] sm:$0xff] 0.0
      %90 = vst [vmem:[#allocation2 + $0x230] sm:$0xff] 0.0
      %91 = vst [vmem:[#allocation2 + $0x238] sm:$0xff] 0.0
      %92 = vst [vmem:[#allocation2 + $0x240] sm:$0xff] 0.0
      %93 = vst [vmem:[#allocation2 + $0x248] sm:$0xff] 0.0
      %94 = vst [vmem:[#allocation2 + $0x250] sm:$0xff] 0.0
      %95 = vst [vmem:[#allocation2 + $0x258] sm:$0xff] 0.0
      %96 = vst [vmem:[#allocation2 + $0x260] sm:$0xff] 0.0
      %97 = vst [vmem:[#allocation2 + $0x268] sm:$0xff] 0.0
    $region13: #{sanbet_layer.1} parent=1 // pred_fallthru
      _
    %p98 = scmp.lt.s32.totalorder 0, 0
    // Predicated region
    $region14: #{sanbet_layer.1} parent=1 // pred_check
      %p99 = pneg %p98
    $region15: #{sanbet_layer.1} parent=1 // pred_check_branch
      %101 = sbr.rel (%p99) target = $region17
    $region16: #{sanbet_layer.1} parent=1 // pred_region
      %v102 = vld [vmem:[#allocation2] sm:$0xff]
      %v103 = vld [vmem:[#allocation2 + $0x8] sm:$0xff]
      %v104 = vld [vmem:[#allocation2 + $0x10] sm:$0xff]
      %v105 = vld [vmem:[#allocation2 + $0x18] sm:$0xff]
      %v106 = vld [vmem:[#allocation2 + $0x20] sm:$0xff]
      %v107 = vld [vmem:[#allocation2 + $0x28] sm:$0xff]
      %v108 = vld [vmem:[#allocation2 + $0x30] sm:$0xff]
      %v109 = vld [vmem:[#allocation2 + $0x38] sm:$0xff]
      %v110 = vld [vmem:[#allocation2 + $0x40] sm:$0xff]
      %v111 = vld [vmem:[#allocation2 + $0x48] sm:$0xff]
      %v112 = vld [vmem:[#allocation2 + $0x50] sm:$0xff]
      %v113 = vld [vmem:[#allocation2 + $0x58] sm:$0xff]
      %v114 = vld [vmem:[#allocation2 + $0x60] sm:$0xff]
      %v115 = vld [vmem:[#allocation2 + $0x68] sm:$0xff]
      %v116 = vld [vmem:[#allocation2 + $0x70] sm:$0xff]
      %v117 = vld [vmem:[#allocation2 + $0x78] sm:$0xff]
      %v118 = vld [vmem:[#allocation2 + $0x80] sm:$0xff]
      %v119 = vld [vmem:[#allocation2 + $0x88] sm:$0xff]
      %v120 = vld [vmem:[#allocation2 + $0x90] sm:$0xff]
      %v121 = vld [vmem:[#allocation2 + $0x98] sm:$0xff]
      %v122 = vld [vmem:[#allocation2 + $0xa0] sm:$0xff]
      %v123 = vld [vmem:[#allocation2 + $0xa8] sm:$0xff]
      %v124 = vld [vmem:[#allocation2 + $0xb0] sm:$0xff]
      %v125 = vld [vmem:[#allocation2 + $0xb8] sm:$0xff]
      %v126 = vld [vmem:[#allocation2 + $0xc0] sm:$0xff]
      %v127 = vld [vmem:[#allocation2 + $0xc8] sm:$0xff]
      %v128 = vld [vmem:[#allocation2 + $0xd0] sm:$0xff]
      %v129 = vld [vmem:[#allocation2 + $0xd8] sm:$0xff]
      %v130 = vld [vmem:[#allocation2 + $0xe0] sm:$0xff]
      %v131 = vld [vmem:[#allocation2 + $0xe8] sm:$0xff]
      %v132 = vld [vmem:[#allocation2 + $0xf0] sm:$0xff]
      %v133 = vld [vmem:[#allocation2 + $0xf8] sm:$0xff]
      %v134 = vld [vmem:[#allocation2 + $0x100] sm:$0xff]
      %v135 = vld [vmem:[#allocation2 + $0x108] sm:$0xff]
      %v136 = vld [vmem:[#allocation2 + $0x110] sm:$0xff]
      %v137 = vld [vmem:[#allocation2 + $0x118] sm:$0xff]
      %v138 = vld [vmem:[#allocation2 + $0x120] sm:$0xff]
      %v139 = vld [vmem:[#allocation2 + $0x128] sm:$0xff]
      %v140 = vld [vmem:[#allocation2 + $0x130] sm:$0xff]
      %v141 = vld [vmem:[#allocation2 + $0x138] sm:$0xff]
      %v142 = vld [vmem:[#allocation2 + $0x140] sm:$0xff]
      %v143 = vld [vmem:[#allocation2 + $0x148] sm:$0xff]
      %v144 = vld [vmem:[#allocation2 + $0x150] sm:$0xff]
      %v145 = vld [vmem:[#allocation2 + $0x158] sm:$0xff]
      %v146 = vld [vmem:[#allocation2 + $0x160] sm:$0xff]
      %v147 = vld [vmem:[#allocation2 + $0x168] sm:$0xff]
      %v148 = vld [vmem:[#allocation2 + $0x170] sm:$0xff]
      %v149 = vld [vmem:[#allocation2 + $0x178] sm:$0xff]
      %v150 = vld [vmem:[#allocation2 + $0x180] sm:$0xff]
      %v151 = vld [vmem:[#allocation2 + $0x188] sm:$0xff]
      %v152 = vld [vmem:[#allocation2 + $0x190] sm:$0xff]
      %v153 = vld [vmem:[#allocation2 + $0x198] sm:$0xff]
      %v154 = vld [vmem:[#allocation2 + $0x1a0] sm:$0xff]
      %v155 = vld [vmem:[#allocation2 + $0x1a8] sm:$0xff]
      %v156 = vld [vmem:[#allocation2 + $0x1b0] sm:$0xff]
      %v157 = vld [vmem:[#allocation2 + $0x1b8] sm:$0xff]
      %v158 = vld [vmem:[#allocation2 + $0x1c0] sm:$0xff]
      %v159 = vld [vmem:[#allocation2 + $0x1c8] sm:$0xff]
      %v160 = vld [vmem:[#allocation2 + $0x1d0] sm:$0xff]
      %v161 = vld [vmem:[#allocation2 + $0x1d8] sm:$0xff]
      %v162 = vld [vmem:[#allocation2 + $0x1e0] sm:$0xff]
      %v163 = vld [vmem:[#allocation2 + $0x1e8] sm:$0xff]
      %v164 = vld [vmem:[#allocation2 + $0x1f0] sm:$0xff]
      %v165 = vld [vmem:[#allocation2 + $0x1f8] sm:$0xff]
      %v166 = vld [vmem:[#allocation2 + $0x200] sm:$0xff]
      %v167 = vld [vmem:[#allocation2 + $0x208] sm:$0xff]
      %v168 = vld [vmem:[#allocation2 + $0x210] sm:$0xff]
      %v169 = vld [vmem:[#allocation2 + $0x218] sm:$0xff]
      %v170 = vld [vmem:[#allocation2 + $0x220] sm:$0xff]
      %v171 = vld [vmem:[#allocation2 + $0x228] sm:$0xff]
      %v172 = vld [vmem:[#allocation2 + $0x230] sm:$0xff]
      %v173 = vld [vmem:[#allocation2 + $0x238] sm:$0xff]
      %v174 = vld [vmem:[#allocation2 + $0x240] sm:$0xff]
      %v175 = vld [vmem:[#allocation2 + $0x248] sm:$0xff]
      %v176 = vld [vmem:[#allocation2 + $0x250] sm:$0xff]
      %v177 = vld [vmem:[#allocation2 + $0x258] sm:$0xff]
      %v178 = vld [vmem:[#allocation2 + $0x260] sm:$0xff]
      %v179 = vld [vmem:[#allocation2 + $0x268] sm:$0xff]
      %v180 = vld [vmem:[%s2] sm:$0xff]
      %v181 = vld [vmem:[%s2 + $0x8] sm:$0xff]
      %v182 = vld [vmem:[%s2 + $0x10] sm:$0xff]
      %v183 = vld [vmem:[%s2 + $0x18] sm:$0xff]
      %v184 = vld [vmem:[%s2 + $0x20] sm:$0xff]
      %v185 = vld [vmem:[%s2 + $0x28] sm:$0xff]
      %v186 = vld [vmem:[%s2 + $0x30] sm:$0xff]
      %v187 = vld [vmem:[%s2 + $0x38] sm:$0xff]
      %v188 = vld [vmem:[%s2 + $0x40] sm:$0xff]
      %v189 = vld [vmem:[%s2 + $0x48] sm:$0xff]
      %v190 = vld [vmem:[%s2 + $0x50] sm:$0xff]
      %v191 = vld [vmem:[%s2 + $0x58] sm:$0xff]
      %v192 = vld [vmem:[%s2 + $0x60] sm:$0xff]
      %v193 = vld [vmem:[%s2 + $0x68] sm:$0xff]
      %v194 = vld [vmem:[%s2 + $0x70] sm:$0xff]
      %v195 = vld [vmem:[%s2 + $0x78] sm:$0xff]
      %v196 = vld [vmem:[%s2 + $0x80] sm:$0xff]
      %v197 = vld [vmem:[%s2 + $0x88] sm:$0xff]
      %v198 = vld [vmem:[%s2 + $0x90] sm:$0xff]
      %v199 = vld [vmem:[%s2 + $0x98] sm:$0xff]
      %v200 = vld [vmem:[%s2 + $0xa0] sm:$0xff]
      %v201 = vld [vmem:[%s2 + $0xa8] sm:$0xff]
      %v202 = vld [vmem:[%s2 + $0xb0] sm:$0xff]
      %v203 = vld [vmem:[%s2 + $0xb8] sm:$0xff]
      %v204 = vld [vmem:[%s2 + $0xc0] sm:$0xff]
      %v205 = vld [vmem:[%s2 + $0xc8] sm:$0xff]
      %v206 = vld [vmem:[%s2 + $0xd0] sm:$0xff]
      %v207 = vld [vmem:[%s2 + $0xd8] sm:$0xff]
      %v208 = vld [vmem:[%s2 + $0xe0] sm:$0xff]
      %v209 = vld [vmem:[%s2 + $0xe8] sm:$0xff]
      %v210 = vld [vmem:[%s2 + $0xf0] sm:$0xff]
      %v211 = vld [vmem:[%s2 + $0xf8] sm:$0xff]
      %v212 = vld [vmem:[%s2 + $0x100] sm:$0xff]
      %v213 = vld [vmem:[%s2 + $0x108] sm:$0xff]
      %v214 = vld [vmem:[%s2 + $0x110] sm:$0xff]
      %v215 = vld [vmem:[%s2 + $0x118] sm:$0xff]
      %v216 = vld [vmem:[%s2 + $0x120] sm:$0xff]
      %v217 = vld [vmem:[%s2 + $0x128] sm:$0xff]
      %v218 = vld [vmem:[%s2 + $0x130] sm:$0xff]
      %v219 = vld [vmem:[%s2 + $0x138] sm:$0xff]
      %v220 = vld [vmem:[%s2 + $0x140] sm:$0xff]
      %v221 = vld [vmem:[%s2 + $0x148] sm:$0xff]
      %v222 = vld [vmem:[%s2 + $0x150] sm:$0xff]
      %v223 = vld [vmem:[%s2 + $0x158] sm:$0xff]
      %v224 = vld [vmem:[%s2 + $0x160] sm:$0xff]
      %v225 = vld [vmem:[%s2 + $0x168] sm:$0xff]
      %v226 = vld [vmem:[%s2 + $0x170] sm:$0xff]
      %v227 = vld [vmem:[%s2 + $0x178] sm:$0xff]
      %v228 = vld [vmem:[%s2 + $0x180] sm:$0xff]
      %v229 = vld [vmem:[%s2 + $0x188] sm:$0xff]
      %v230 = vld [vmem:[%s2 + $0x190] sm:$0xff]
      %v231 = vld [vmem:[%s2 + $0x198] sm:$0xff]
      %v232 = vld [vmem:[%s3] sm:$0xff]
      %v233 = vld [vmem:[%s3 + $0x8] sm:$0xff]
      %v234 = vld [vmem:[%s3 + $0x10] sm:$0xff]
      %v235 = vld [vmem:[%s3 + $0x18] sm:$0xff]
      %v236 = vld [vmem:[%s3 + $0x20] sm:$0xff]
      %v237 = vld [vmem:[%s3 + $0x28] sm:$0xff]
      %v238 = vld [vmem:[%s3 + $0x30] sm:$0xff]
      %v239 = vld [vmem:[%s3 + $0x38] sm:$0xff]
      %v240 = vld [vmem:[%s3 + $0x40] sm:$0xff]
      %v241 = vld [vmem:[%s3 + $0x48] sm:$0xff]
      %v242 = vld [vmem:[%s3 + $0x50] sm:$0xff]
      %v243 = vld [vmem:[%s3 + $0x58] sm:$0xff]
      %v244 = vld [vmem:[%s3 + $0x60] sm:$0xff]
      %v245 = vld [vmem:[%s3 + $0x68] sm:$0xff]
      %v246 = vld [vmem:[%s3 + $0x70] sm:$0xff]
      %v247 = vld [vmem:[%s3 + $0x78] sm:$0xff]
      %v248 = vld [vmem:[%s3 + $0x80] sm:$0xff]
      %v249 = vld [vmem:[%s3 + $0x88] sm:$0xff]
      %v250 = vld [vmem:[%s3 + $0x90] sm:$0xff]
      %v251 = vld [vmem:[%s3 + $0x98] sm:$0xff]
      %v252 = vld [vmem:[%s3 + $0xa0] sm:$0xff]
      %v253 = vld [vmem:[%s3 + $0xa8] sm:$0xff]
      %v254 = vld [vmem:[%s3 + $0xb0] sm:$0xff]
      %v255 = vld [vmem:[%s3 + $0xb8] sm:$0xff]
      %v256 = vld [vmem:[%s3 + $0xc0] sm:$0xff]
      %v257 = vld [vmem:[%s3 + $0xc8] sm:$0xff]
      %v258 = vld [vmem:[%s3 + $0xd0] sm:$0xff]
      %v259 = vld [vmem:[%s3 + $0xd8] sm:$0xff]
      %v260 = vld [vmem:[%s3 + $0xe0] sm:$0xff]
      %v261 = vld [vmem:[%s3 + $0xe8] sm:$0xff]
      %v262 = vld [vmem:[%s3 + $0xf0] sm:$0xff]
      %v263 = vld [vmem:[%s3 + $0xf8] sm:$0xff]
      %v264 = vld [vmem:[%s3 + $0x100] sm:$0xff]
      %v265 = vld [vmem:[%s3 + $0x108] sm:$0xff]
      %v266 = vld [vmem:[%s3 + $0x110] sm:$0xff]
      %v267 = vld [vmem:[%s3 + $0x118] sm:$0xff]
      %v268 = vld [vmem:[%s3 + $0x120] sm:$0xff]
      %v269 = vld [vmem:[%s3 + $0x128] sm:$0xff]
      %v270 = vld [vmem:[%s3 + $0x130] sm:$0xff]
      %v271 = vld [vmem:[%s3 + $0x138] sm:$0xff]
      %v272 = vld [vmem:[%s3 + $0x140] sm:$0xff]
      %v273 = vld [vmem:[%s3 + $0x148] sm:$0xff]
      %v274 = vld [vmem:[%s3 + $0x150] sm:$0xff]
      %v275 = vld [vmem:[%s3 + $0x158] sm:$0xff]
      %v276 = vld [vmem:[%s3 + $0x160] sm:$0xff]
      %v277 = vld [vmem:[%s3 + $0x168] sm:$0xff]
      %v278 = vld [vmem:[%s3 + $0x170] sm:$0xff]
      %v279 = vld [vmem:[%s3 + $0x178] sm:$0xff]
      %v280 = vld [vmem:[%s3 + $0x180] sm:$0xff]
      %v281 = vld [vmem:[%s3 + $0x188] sm:$0xff]
      %v282 = vld [vmem:[%s3 + $0x190] sm:$0xff]
      %v283 = vld [vmem:[%s3 + $0x198] sm:$0xff]
      %v284 = vld [vmem:[%s3 + $0x1a0] sm:$0xff]
      %v285 = vld [vmem:[%s3 + $0x1a8] sm:$0xff]
      %v286 = vld [vmem:[%s3 + $0x1b0] sm:$0xff]
      %v287 = vld [vmem:[%s3 + $0x1b8] sm:$0xff]
      %v288 = vld [vmem:[%s3 + $0x1c0] sm:$0xff]
      %v289 = vld [vmem:[%s3 + $0x1c8] sm:$0xff]
      %v290 = vld [vmem:[%s3 + $0x1d0] sm:$0xff]
      %v291 = vld [vmem:[%s3 + $0x1d8] sm:$0xff]
      %v292 = vld [vmem:[%s3 + $0x1e0] sm:$0xff]
      %v293 = vld [vmem:[%s3 + $0x1e8] sm:$0xff]
      %v294 = vld [vmem:[%s3 + $0x1f0] sm:$0xff]
      %v295 = vld [vmem:[%s3 + $0x1f8] sm:$0xff]
      %v296 = vld [vmem:[%s3 + $0x200] sm:$0xff]
      %v297 = vld [vmem:[%s3 + $0x208] sm:$0xff]
      %v298 = vld [vmem:[%s3 + $0x210] sm:$0xff]
      %v299 = vld [vmem:[%s3 + $0x218] sm:$0xff]
      %v300 = vld [vmem:[%s3 + $0x220] sm:$0xff]
      %v301 = vld [vmem:[%s3 + $0x228] sm:$0xff]
      %v302 = vld [vmem:[%s3 + $0x230] sm:$0xff]
      %v303 = vld [vmem:[%s3 + $0x238] sm:$0xff]
      %v304 = vld [vmem:[%s3 + $0x240] sm:$0xff]
      %v305 = vld [vmem:[%s3 + $0x248] sm:$0xff]
      %v306 = vld [vmem:[%s3 + $0x250] sm:$0xff]
      %v307 = vld [vmem:[%s3 + $0x258] sm:$0xff]
      %v308 = vld [vmem:[%s3 + $0x260] sm:$0xff]
      %v309 = vld [vmem:[%s3 + $0x268] sm:$0xff]
      %v310 = vld [vmem:[%s3 + $0x270] sm:$0xff]
      %v311 = vld [vmem:[%s3 + $0x278] sm:$0xff]
      %v312 = vld [vmem:[%s3 + $0x280] sm:$0xff]
      %v313 = vld [vmem:[%s3 + $0x288] sm:$0xff]
      %v314 = vld [vmem:[%s3 + $0x290] sm:$0xff]
      %v315 = vld [vmem:[%s3 + $0x298] sm:$0xff]
      %v316 = vld [vmem:[%s3 + $0x2a0] sm:$0xff]
      %v317 = vld [vmem:[%s3 + $0x2a8] sm:$0xff]
      %v318 = vld [vmem:[%s3 + $0x2b0] sm:$0xff]
      %v319 = vld [vmem:[%s3 + $0x2b8] sm:$0xff]
      %v320 = vld [vmem:[%s3 + $0x2c0] sm:$0xff]
      %v321 = vld [vmem:[%s3 + $0x2c8] sm:$0xff]
      %v322 = vld [vmem:[%s3 + $0x2d0] sm:$0xff]
      %v323 = vld [vmem:[%s3 + $0x2d8] sm:$0xff]
      %v324 = vld [vmem:[%s3 + $0x2e0] sm:$0xff]
      %v325 = vld [vmem:[%s3 + $0x2e8] sm:$0xff]
      %v326 = vld [vmem:[%s3 + $0x2f0] sm:$0xff]
      %v327 = vld [vmem:[%s3 + $0x2f8] sm:$0xff]
      %328 = vmatprep.subr.mxu0 %v233
      %329 = vmatpush1.msra.mxu0 %v232
      %330 = vmatprep.subr.mxu0 %v236
      %331 = vmatpush1.msra.mxu0 %v235
      %332 = vmatprep.subr.mxu0 %v239
      %333 = vmatpush1.msra.mxu0 %v238
      %334 = vmatprep.subr.mxu0 %v242
      %335 = vmatpush1.msra.mxu0 %v241
      %336 = vmatprep.subr.mxu0 %v245
      %337 = vmatpush1.msra.mxu0 %v244
      %338 = vmatprep.subr.mxu0 %v248
      %339 = vmatpush1.msra.mxu0 %v247
      %340 = vmatprep.subr.mxu0 %v251
      %341 = vmatpush1.msra.mxu0 %v250
      %342 = vmatprep.subr.mxu0 %v254
      %343 = vmatpush1.msra.mxu0 %v253
      %344 = vmatprep.subr.mxu0 %v257
      %345 = vmatpush1.msra.mxu0 %v256
      %346 = vmatprep.subr.mxu0 %v260
      %347 = vmatpush1.msra.mxu0 %v259
      %348 = vmatprep.subr.mxu0 %v263
      %349 = vmatpush1.msra.mxu0 %v262
      %350 = vmatprep.subr.mxu0 %v266
      %351 = vmatpush1.msra.mxu0 %v265
      %352 = vmatprep.subr.mxu0 %v269
      %353 = vmatpush1.msra.mxu0 %v268
      %354 = vmatprep.subr.mxu0 %v272
      %355 = vmatpush1.msra.mxu0 %v271
      %356 = vmatprep.subr.mxu0 %v275
      %357 = vmatpush1.msra.mxu0 %v274
      %358 = vmatprep.subr.mxu0 %v278
      %359 = vmatpush1.msra.mxu0 %v277
      %360 = vmatprep.subr.mxu0 %v281
      %361 = vmatpush1.msra.mxu0 %v280
      %362 = vmatprep.subr.mxu0 %v284
      %363 = vmatpush1.msra.mxu0 %v283
      %364 = vmatprep.subr.mxu0 %v287
      %365 = vmatpush1.msra.mxu0 %v286
      %366 = vmatprep.subr.mxu0 %v290
      %367 = vmatpush1.msra.mxu0 %v289
      %368 = vmatprep.subr.mxu0 %v293
      %369 = vmatpush1.msra.mxu0 %v292
      %370 = vmatprep.subr.mxu0 %v296
      %371 = vmatpush1.msra.mxu0 %v295
      %372 = vmatprep.subr.mxu0 %v299
      %373 = vmatpush1.msra.mxu0 %v298
      %374 = vmatprep.subr.mxu0 %v302
      %375 = vmatpush1.msra.mxu0 %v301
      %376 = vmatprep.subr.mxu0 %v305
      %377 = vmatpush1.msra.mxu0 %v304
      %378 = vmatprep.subr.mxu0 %v308
      %379 = vmatpush1.msra.mxu0 %v307
      %380 = vmatprep.subr.mxu0 %v311
      %381 = vmatpush1.msra.mxu0 %v310
      %382 = vmatprep.subr.mxu0 %v314
      %383 = vmatpush1.msra.mxu0 %v313
      %384 = vmatprep.subr.mxu0 %v317
      %385 = vmatpush1.msra.mxu0 %v316
      %386 = vmatprep.subr.mxu0 %v320
      %387 = vmatpush1.msra.mxu0 %v319
      %388 = vmatprep.subr.mxu0 %v323
      %389 = vmatpush1.msra.mxu0 %v322
      %390 = vmatprep.subr.mxu0 %v326
      %391 = vmatpush1.msra.mxu0 %v325
      %392 = vmatprep.mubr.f32.mxu0 %v181
      %393 = vmatmul.mubr.f32.gmra.mrb[0].mxu0 %v180
      %v394 = vpop.f32.mrb[0].mxu0
      %v395 = vadd.f32 0.0, %v394
      %v396 = vpop.f32.mrb[0].mxu0
      %v397 = vadd.f32 0.0, %v396
      %398 = vmatprep.mubr.f32.mxu0 %v183
      %399 = vmatmul.mubr.f32.gmra.mrb[0].mxu0 %v182
      %v400 = vpop.f32.mrb[0].mxu0
      %v401 = vadd.f32 0.0, %v400
      %v402 = vpop.f32.mrb[0].mxu0
      %v403 = vadd.f32 0.0, %v402
      %404 = vmatprep.mubr.f32.mxu0 %v185
      %405 = vmatmul.mubr.f32.gmra.mrb[0].mxu0 %v184
      %v406 = vpop.f32.mrb[0].mxu0
      %v407 = vadd.f32 0.0, %v406
      %v408 = vpop.f32.mrb[0].mxu0
      %v409 = vadd.f32 0.0, %v408
      %410 = vmatprep.mubr.f32.mxu0 %v187
      %411 = vmatmul.mubr.f32.gmra.mrb[0].mxu0 %v186
      %v412 = vpop.f32.mrb[0].mxu0
      %v413 = vadd.f32 0.0, %v412
      %v414 = vpop.f32.mrb[0].mxu0
      %v415 = vadd.f32 0.0, %v414
      %416 = vmatprep.mubr.f32.mxu0 %v189
      %417 = vmatmul.mubr.f32.gmra.mrb[0].mxu0 %v188
      %v418 = vpop.f32.mrb[0].mxu0
      %v419 = vadd.f32 0.0, %v418
      %v420 = vpop.f32.mrb[0].mxu0
      %v421 = vadd.f32 0.0, %v420
      %422 = vmatprep.mubr.f32.mxu0 %v191
      %423 = vmatmul.mubr.f32.gmra.mrb[0].mxu0 %v190
      %v424 = vpop.f32.mrb[0].mxu0
      %v425 = vadd.f32 0.0, %v424
      %v426 = vpop.f32.mrb[0].mxu0
      %v427 = vadd.f32 0.0, %v426
      %428 = vmatprep.mubr.f32.mxu0 %v193
      %429 = vmatmul.mubr.f32.gmra.mrb[0].mxu0 %v192
      %v430 = vpop.f32.mrb[0].mxu0
      %v431 = vadd.f32 0.0, %v430
      %v432 = vpop.f32.mrb[0].mxu0
      %v433 = vadd.f32 0.0, %v432
      %434 = vmatprep.mubr.f32.mxu0 %v195
      %435 = vmatmul.mubr.f32.gmra.mrb[0].mxu0 %v194
      %v436 = vpop.f32.mrb[0].mxu0
      %v437 = vadd.f32 0.0, %v436
      %v438 = vpop.f32.mrb[0].mxu0
      %v439 = vadd.f32 0.0, %v438
      %440 = vmatprep.mubr.f32.mxu0 %v197
      %441 = vmatmul.mubr.f32.gmra.mrb[0].mxu0 %v196
      %v442 = vpop.f32.mrb[0].mxu0
      %v443 = vadd.f32 0.0, %v442
      %v444 = vpop.f32.mrb[0].mxu0
      %v445 = vadd.f32 0.0, %v444
      %446 = vmatprep.mubr.f32.mxu0 %v199
      %447 = vmatmul.mubr.f32.gmra.mrb[0].mxu0 %v198
      %v448 = vpop.f32.mrb[0].mxu0
      %v449 = vadd.f32 0.0, %v448
      %v450 = vpop.f32.mrb[0].mxu0
      %v451 = vadd.f32 0.0, %v450
      %452 = vmatprep.mubr.f32.mxu0 %v201
      %453 = vmatmul.mubr.f32.gmra.mrb[0].mxu0 %v200
      %v454 = vpop.f32.mrb[0].mxu0
      %v455 = vadd.f32 0.0, %v454
      %v456 = vpop.f32.mrb[0].mxu0
      %v457 = vadd.f32 0.0, %v456
      %458 = vmatprep.mubr.f32.mxu0 %v203
      %459 = vmatmul.mubr.f32.gmra.mrb[0].mxu0 %v202
      %v460 = vpop.f32.mrb[0].mxu0
      %v461 = vadd.f32 0.0, %v460
      %v462 = vpop.f32.mrb[0].mxu0
      %v463 = vadd.f32 0.0, %v462
      %464 = vmatprep.mubr.f32.mxu0 %v205
      %465 = vmatmul.mubr.f32.gmra.mrb[0].mxu0 %v204
      %v466 = vpop.f32.mrb[0].mxu0
      %v467 = vadd.f32 0.0, %v466
      %v468 = vpop.f32.mrb[0].mxu0
      %v469 = vadd.f32 0.0, %v468
      %470 = vmatprep.mubr.f32.mxu0 %v207
      %471 = vmatmul.mubr.f32.gmra.mrb[0].mxu0 %v206
      %v472 = vpop.f32.mrb[0].mxu0
      %v473 = vadd.f32 0.0, %v472
      %v474 = vpop.f32.mrb[0].mxu0
      %v475 = vadd.f32 0.0, %v474
      %476 = vmatprep.mubr.f32.mxu0 %v209
      %477 = vmatmul.mubr.f32.gmra.mrb[0].mxu0 %v208
      %v478 = vpop.f32.mrb[0].mxu0
      %v479 = vadd.f32 0.0, %v478
      %v480 = vpop.f32.mrb[0].mxu0
      %v481 = vadd.f32 0.0, %v480
      %482 = vmatprep.mubr.f32.mxu0 %v211
      %483 = vmatmul.mubr.f32.gmra.mrb[0].mxu0 %v210
      %v484 = vpop.f32.mrb[0].mxu0
      %v485 = vadd.f32 0.0, %v484
      %v486 = vpop.f32.mrb[0].mxu0
      %v487 = vadd.f32 0.0, %v486
      %488 = vmatprep.mubr.f32.mxu0 %v213
      %489 = vmatmul.mubr.f32.gmra.mrb[0].mxu0 %v212
      %v490 = vpop.f32.mrb[0].mxu0
      %v491 = vadd.f32 0.0, %v490
      %v492 = vpop.f32.mrb[0].mxu0
      %v493 = vadd.f32 0.0, %v492
      %494 = vmatprep.mubr.f32.mxu0 %v215
      %495 = vmatmul.mubr.f32.gmra.mrb[0].mxu0 %v214
      %v496 = vpop.f32.mrb[0].mxu0
      %v497 = vadd.f32 0.0, %v496
      %v498 = vpop.f32.mrb[0].mxu0
      %v499 = vadd.f32 0.0, %v498
      %500 = vmatprep.mubr.f32.mxu0 %v217
      %501 = vmatmul.mubr.f32.gmra.mrb[0].mxu0 %v216
      %v502 = vpop.f32.mrb[0].mxu0
      %v503 = vadd.f32 0.0, %v502
      %v504 = vpop.f32.mrb[0].mxu0
      %v505 = vadd.f32 0.0, %v504
      %506 = vmatprep.mubr.f32.mxu0 %v219
      %507 = vmatmul.mubr.f32.gmra.mrb[0].mxu0 %v218
      %v508 = vpop.f32.mrb[0].mxu0
      %v509 = vadd.f32 0.0, %v508
      %v510 = vpop.f32.mrb[0].mxu0
      %v511 = vadd.f32 0.0, %v510
      %512 = vmatprep.mubr.f32.mxu0 %v221
      %513 = vmatmul.mubr.f32.gmra.mrb[0].mxu0 %v220
      %v514 = vpop.f32.mrb[0].mxu0
      %v515 = vadd.f32 0.0, %v514
      %v516 = vpop.f32.mrb[0].mxu0
      %v517 = vadd.f32 0.0, %v516
      %518 = vmatprep.mubr.f32.mxu0 %v223
      %519 = vmatmul.mubr.f32.gmra.mrb[0].mxu0 %v222
      %v520 = vpop.f32.mrb[0].mxu0
      %v521 = vadd.f32 0.0, %v520
      %v522 = vpop.f32.mrb[0].mxu0
      %v523 = vadd.f32 0.0, %v522
      %524 = vmatprep.mubr.f32.mxu0 %v225
      %525 = vmatmul.mubr.f32.gmra.mrb[0].mxu0 %v224
      %v526 = vpop.f32.mrb[0].mxu0
      %v527 = vadd.f32 0.0, %v526
      %v528 = vpop.f32.mrb[0].mxu0
      %v529 = vadd.f32 0.0, %v528
      %530 = vmatprep.mubr.f32.mxu0 %v227
      %531 = vmatmul.mubr.f32.gmra.mrb[0].mxu0 %v226
      %v532 = vpop.f32.mrb[0].mxu0
      %v533 = vadd.f32 0.0, %v532
      %v534 = vpop.f32.mrb[0].mxu0
      %v535 = vadd.f32 0.0, %v534
      %536 = vmatprep.mubr.f32.mxu0 %v229
      %537 = vmatmul.mubr.f32.gmra.mrb[0].mxu0 %v228
      %v538 = vpop.f32.mrb[0].mxu0
      %v539 = vadd.f32 0.0, %v538
      %v540 = vpop.f32.mrb[0].mxu0
      %v541 = vadd.f32 0.0, %v540
      %542 = vmatprep.mubr.f32.mxu0 %v231
      %543 = vmatmul.mubr.f32.gmra.mrb[0].mxu0 %v230
      %v544 = vpop.f32.mrb[0].mxu0
      %v545 = vadd.f32 0.0, %v544
      %v546 = vpop.f32.mrb[0].mxu0
      %v547 = vadd.f32 0.0, %v546
      %548 = vdwg.mxu0
      %549 = vmatprep.subr.mxu0 0.0
      %550 = vmatpush1.msra.mxu0 %v234
      %551 = vmatprep.subr.mxu0 0.0
      %552 = vmatpush1.msra.mxu0 %v237
      %553 = vmatprep.subr.mxu0 0.0
      %554 = vmatpush1.msra.mxu0 %v240
      %555 = vmatprep.subr.mxu0 0.0
      %556 = vmatpush1.msra.mxu0 %v243
      %557 = vmatprep.subr.mxu0 0.0
      %558 = vmatpush1.msra.mxu0 %v246
      %559 = vmatprep.subr.mxu0 0.0
      %560 = vmatpush1.msra.mxu0 %v249
      %561 = vmatprep.subr.mxu0 0.0
      %562 = vmatpush1.msra.mxu0 %v252
      %563 = vmatprep.subr.mxu0 0.0
      %564 = vmatpush1.msra.mxu0 %v255
      %565 = vmatprep.subr.mxu0 0.0
      %566 = vmatpush1.msra.mxu0 %v258
      %567 = vmatprep.subr.mxu0 0.0
      %568 = vmatpush1.msra.mxu0 %v261
      %569 = vmatprep.subr.mxu0 0.0
      %570 = vmatpush1.msra.mxu0 %v264
      %571 = vmatprep.subr.mxu0 0.0
      %572 = vmatpush1.msra.mxu0 %v267
      %573 = vmatprep.subr.mxu0 0.0
      %574 = vmatpush1.msra.mxu0 %v270
      %575 = vmatprep.subr.mxu0 0.0
      %576 = vmatpush1.msra.mxu0 %v273
      %577 = vmatprep.subr.mxu0 0.0
      %578 = vmatpush1.msra.mxu0 %v276
      %579 = vmatprep.subr.mxu0 0.0
      %580 = vmatpush1.msra.mxu0 %v279
      %581 = vmatprep.subr.mxu0 0.0
      %582 = vmatpush1.msra.mxu0 %v282
      %583 = vmatprep.subr.mxu0 0.0
      %584 = vmatpush1.msra.mxu0 %v285
      %585 = vmatprep.subr.mxu0 0.0
      %586 = vmatpush1.msra.mxu0 %v288
      %587 = vmatprep.subr.mxu0 0.0
      %588 = vmatpush1.msra.mxu0 %v291
      %589 = vmatprep.subr.mxu0 0.0
      %590 = vmatpush1.msra.mxu0 %v294
      %591 = vmatprep.subr.mxu0 0.0
      %592 = vmatpush1.msra.mxu0 %v297
      %593 = vmatprep.subr.mxu0 0.0
      %594 = vmatpush1.msra.mxu0 %v300
      %595 = vmatprep.subr.mxu0 0.0
      %596 = vmatpush1.msra.mxu0 %v303
      %597 = vmatprep.subr.mxu0 0.0
      %598 = vmatpush1.msra.mxu0 %v306
      %599 = vmatprep.subr.mxu0 0.0
      %600 = vmatpush1.msra.mxu0 %v309
      %601 = vmatprep.subr.mxu0 0.0
      %602 = vmatpush1.msra.mxu0 %v312
      %603 = vmatprep.subr.mxu0 0.0
      %604 = vmatpush1.msra.mxu0 %v315
      %605 = vmatprep.subr.mxu0 0.0
      %606 = vmatpush1.msra.mxu0 %v318
      %607 = vmatprep.subr.mxu0 0.0
      %608 = vmatpush1.msra.mxu0 %v321
      %609 = vmatprep.subr.mxu0 0.0
      %610 = vmatpush1.msra.mxu0 %v324
      %611 = vmatprep.subr.mxu0 0.0
      %612 = vmatpush1.msra.mxu0 %v327
      %613 = vmatprep.mubr.f32.mxu0 %v181
      %614 = vmatmul.mubr.f32.gmra.mrb[0].mxu0 %v180
      %v615 = vpop.f32.mrb[0].mxu0
      %v616 = vadd.f32 0.0, %v615
      %v617 = vpop.f32.mrb[0].mxu0
      %618 = vmatprep.mubr.f32.mxu0 %v183
      %619 = vmatmul.mubr.f32.gmra.mrb[0].mxu0 %v182
      %v620 = vpop.f32.mrb[0].mxu0
      %v621 = vadd.f32 0.0, %v620
      %v622 = vpop.f32.mrb[0].mxu0
      %623 = vmatprep.mubr.f32.mxu0 %v185
      %624 = vmatmul.mubr.f32.gmra.mrb[0].mxu0 %v184
      %v625 = vpop.f32.mrb[0].mxu0
      %v626 = vadd.f32 0.0, %v625
      %v627 = vpop.f32.mrb[0].mxu0
      %628 = vmatprep.mubr.f32.mxu0 %v187
      %629 = vmatmul.mubr.f32.gmra.mrb[0].mxu0 %v186
      %v630 = vpop.f32.mrb[0].mxu0
      %v631 = vadd.f32 0.0, %v630
      %v632 = vpop.f32.mrb[0].mxu0
      %633 = vmatprep.mubr.f32.mxu0 %v189
      %634 = vmatmul.mubr.f32.gmra.mrb[0].mxu0 %v188
      %v635 = vpop.f32.mrb[0].mxu0
      %v636 = vadd.f32 0.0, %v635
      %v637 = vpop.f32.mrb[0].mxu0
      %638 = vmatprep.mubr.f32.mxu0 %v191
      %639 = vmatmul.mubr.f32.gmra.mrb[0].mxu0 %v190
      %v640 = vpop.f32.mrb[0].mxu0
      %v641 = vadd.f32 0.0, %v640
      %v642 = vpop.f32.mrb[0].mxu0
      %643 = vmatprep.mubr.f32.mxu0 %v193
      %644 = vmatmul.mubr.f32.gmra.mrb[0].mxu0 %v192
      %v645 = vpop.f32.mrb[0].mxu0
      %v646 = vadd.f32 0.0, %v645
      %v647 = vpop.f32.mrb[0].mxu0
      %648 = vmatprep.mubr.f32.mxu0 %v195
      %649 = vmatmul.mubr.f32.gmra.mrb[0].mxu0 %v194
      %v650 = vpop.f32.mrb[0].mxu0
      %v651 = vadd.f32 0.0, %v650
      %v652 = vpop.f32.mrb[0].mxu0
      %653 = vmatprep.mubr.f32.mxu0 %v197
      %654 = vmatmul.mubr.f32.gmra.mrb[0].mxu0 %v196
      %v655 = vpop.f32.mrb[0].mxu0
      %v656 = vadd.f32 0.0, %v655
      %v657 = vpop.f32.mrb[0].mxu0
      %658 = vmatprep.mubr.f32.mxu0 %v199
      %659 = vmatmul.mubr.f32.gmra.mrb[0].mxu0 %v198
      %v660 = vpop.f32.mrb[0].mxu0
      %v661 = vadd.f32 0.0, %v660
      %v662 = vpop.f32.mrb[0].mxu0
      %663 = vmatprep.mubr.f32.mxu0 %v201
      %664 = vmatmul.mubr.f32.gmra.mrb[0].mxu0 %v200
      %v665 = vpop.f32.mrb[0].mxu0
      %v666 = vadd.f32 0.0, %v665
      %v667 = vpop.f32.mrb[0].mxu0
      %668 = vmatprep.mubr.f32.mxu0 %v203
      %669 = vmatmul.mubr.f32.gmra.mrb[0].mxu0 %v202
      %v670 = vpop.f32.mrb[0].mxu0
      %v671 = vadd.f32 0.0, %v670
      %v672 = vpop.f32.mrb[0].mxu0
      %673 = vmatprep.mubr.f32.mxu0 %v205
      %674 = vmatmul.mubr.f32.gmra.mrb[0].mxu0 %v204
      %v675 = vpop.f32.mrb[0].mxu0
      %v676 = vadd.f32 0.0, %v675
      %v677 = vpop.f32.mrb[0].mxu0
      %678 = vmatprep.mubr.f32.mxu0 %v207
      %679 = vmatmul.mubr.f32.gmra.mrb[0].mxu0 %v206
      %v680 = vpop.f32.mrb[0].mxu0
      %v681 = vadd.f32 0.0, %v680
      %v682 = vpop.f32.mrb[0].mxu0
      %683 = vmatprep.mubr.f32.mxu0 %v209
      %684 = vmatmul.mubr.f32.gmra.mrb[0].mxu0 %v208
      %v685 = vpop.f32.mrb[0].mxu0
      %v686 = vadd.f32 0.0, %v685
      %v687 = vpop.f32.mrb[0].mxu0
      %688 = vmatprep.mubr.f32.mxu0 %v211
      %689 = vmatmul.mubr.f32.gmra.mrb[0].mxu0 %v210
      %v690 = vpop.f32.mrb[0].mxu0
      %v691 = vadd.f32 0.0, %v690
      %v692 = vpop.f32.mrb[0].mxu0
      %693 = vmatprep.mubr.f32.mxu0 %v213
      %694 = vmatmul.mubr.f32.gmra.mrb[0].mxu0 %v212
      %v695 = vpop.f32.mrb[0].mxu0
      %v696 = vadd.f32 0.0, %v695
      %v697 = vpop.f32.mrb[0].mxu0
      %698 = vmatprep.mubr.f32.mxu0 %v215
      %699 = vmatmul.mubr.f32.gmra.mrb[0].mxu0 %v214
      %v700 = vpop.f32.mrb[0].mxu0
      %v701 = vadd.f32 0.0, %v700
      %v702 = vpop.f32.mrb[0].mxu0
      %703 = vmatprep.mubr.f32.mxu0 %v217
      %704 = vmatmul.mubr.f32.gmra.mrb[0].mxu0 %v216
      %v705 = vpop.f32.mrb[0].mxu0
      %v706 = vadd.f32 0.0, %v705
      %v707 = vpop.f32.mrb[0].mxu0
      %708 = vmatprep.mubr.f32.mxu0 %v219
      %709 = vmatmul.mubr.f32.gmra.mrb[0].mxu0 %v218
      %v710 = vpop.f32.mrb[0].mxu0
      %v711 = vadd.f32 0.0, %v710
      %v712 = vpop.f32.mrb[0].mxu0
      %713 = vmatprep.mubr.f32.mxu0 %v221
      %714 = vmatmul.mubr.f32.gmra.mrb[0].mxu0 %v220
      %v715 = vpop.f32.mrb[0].mxu0
      %v716 = vadd.f32 0.0, %v715
      %v717 = vpop.f32.mrb[0].mxu0
      %718 = vmatprep.mubr.f32.mxu0 %v223
      %719 = vmatmul.mubr.f32.gmra.mrb[0].mxu0 %v222
      %v720 = vpop.f32.mrb[0].mxu0
      %v721 = vadd.f32 0.0, %v720
      %v722 = vpop.f32.mrb[0].mxu0
      %723 = vmatprep.mubr.f32.mxu0 %v225
      %724 = vmatmul.mubr.f32.gmra.mrb[0].mxu0 %v224
      %v725 = vpop.f32.mrb[0].mxu0
      %v726 = vadd.f32 0.0, %v725
      %v727 = vpop.f32.mrb[0].mxu0
      %728 = vmatprep.mubr.f32.mxu0 %v227
      %729 = vmatmul.mubr.f32.gmra.mrb[0].mxu0 %v226
      %v730 = vpop.f32.mrb[0].mxu0
      %v731 = vadd.f32 0.0, %v730
      %v732 = vpop.f32.mrb[0].mxu0
      %733 = vmatprep.mubr.f32.mxu0 %v229
      %734 = vmatmul.mubr.f32.gmra.mrb[0].mxu0 %v228
      %v735 = vpop.f32.mrb[0].mxu0
      %v736 = vadd.f32 0.0, %v735
      %v737 = vpop.f32.mrb[0].mxu0
      %738 = vmatprep.mubr.f32.mxu0 %v231
      %739 = vmatmul.mubr.f32.gmra.mrb[0].mxu0 %v230
      %v740 = vpop.f32.mrb[0].mxu0
      %v741 = vadd.f32 0.0, %v740
      %v742 = vpop.f32.mrb[0].mxu0
      %743 = vdwg.mxu0
      %v744 = vadd.f32 %v102, %v395
      %v745 = vadd.f32 %v103, %v397
      %v746 = vadd.f32 %v104, %v616
      %v747 = vadd.f32 %v105, %v401
      %v748 = vadd.f32 %v106, %v403
      %v749 = vadd.f32 %v107, %v621
      %v750 = vadd.f32 %v108, %v407
      %v751 = vadd.f32 %v109, %v409
      %v752 = vadd.f32 %v110, %v626
      %v753 = vadd.f32 %v111, %v413
      %v754 = vadd.f32 %v112, %v415
      %v755 = vadd.f32 %v113, %v631
      %v756 = vadd.f32 %v114, %v419
      %v757 = vadd.f32 %v115, %v421
      %v758 = vadd.f32 %v116, %v636
      %v759 = vadd.f32 %v117, %v425
      %v760 = vadd.f32 %v118, %v427
      %v761 = vadd.f32 %v119, %v641
      %v762 = vadd.f32 %v120, %v431
      %v763 = vadd.f32 %v121, %v433
      %v764 = vadd.f32 %v122, %v646
      %v765 = vadd.f32 %v123, %v437
      %v766 = vadd.f32 %v124, %v439
      %v767 = vadd.f32 %v125, %v651
      %v768 = vadd.f32 %v126, %v443
      %v769 = vadd.f32 %v127, %v445
      %v770 = vadd.f32 %v128, %v656
      %v771 = vadd.f32 %v129, %v449
      %v772 = vadd.f32 %v130, %v451
      %v773 = vadd.f32 %v131, %v661
      %v774 = vadd.f32 %v132, %v455
      %v775 = vadd.f32 %v133, %v457
      %v776 = vadd.f32 %v134, %v666
      %v777 = vadd.f32 %v135, %v461
      %v778 = vadd.f32 %v136, %v463
      %v779 = vadd.f32 %v137, %v671
      %v780 = vadd.f32 %v138, %v467
      %v781 = vadd.f32 %v139, %v469
      %v782 = vadd.f32 %v140, %v676
      %v783 = vadd.f32 %v141, %v473
      %v784 = vadd.f32 %v142, %v475
      %v785 = vadd.f32 %v143, %v681
      %v786 = vadd.f32 %v144, %v479
      %v787 = vadd.f32 %v145, %v481
      %v788 = vadd.f32 %v146, %v686
      %v789 = vadd.f32 %v147, %v485
      %v790 = vadd.f32 %v148, %v487
      %v791 = vadd.f32 %v149, %v691
      %v792 = vadd.f32 %v150, %v491
      %v793 = vadd.f32 %v151, %v493
      %v794 = vadd.f32 %v152, %v696
      %v795 = vadd.f32 %v153, %v497
      %v796 = vadd.f32 %v154, %v499
      %v797 = vadd.f32 %v155, %v701
      %v798 = vadd.f32 %v156, %v503
      %v799 = vadd.f32 %v157, %v505
      %v800 = vadd.f32 %v158, %v706
      %v801 = vadd.f32 %v159, %v509
      %v802 = vadd.f32 %v160, %v511
      %v803 = vadd.f32 %v161, %v711
      %v804 = vadd.f32 %v162, %v515
      %v805 = vadd.f32 %v163, %v517
      %v806 = vadd.f32 %v164, %v716
      %v807 = vadd.f32 %v165, %v521
      %v808 = vadd.f32 %v166, %v523
      %v809 = vadd.f32 %v167, %v721
      %v810 = vadd.f32 %v168, %v527
      %v811 = vadd.f32 %v169, %v529
      %v812 = vadd.f32 %v170, %v726
      %v813 = vadd.f32 %v171, %v533
      %v814 = vadd.f32 %v172, %v535
      %v815 = vadd.f32 %v173, %v731
      %v816 = vadd.f32 %v174, %v539
      %v817 = vadd.f32 %v175, %v541
      %v818 = vadd.f32 %v176, %v736
      %v819 = vadd.f32 %v177, %v545
      %v820 = vadd.f32 %v178, %v547
      %v821 = vadd.f32 %v179, %v741
      %822 = vst [vmem:[#allocation2] sm:$0xff] %v744
      %823 = vst [vmem:[#allocation2 + $0x8] sm:$0xff] %v745
      %824 = vst [vmem:[#allocation2 + $0x10] sm:$0xff] %v746
      %825 = vst [vmem:[#allocation2 + $0x18] sm:$0xff] %v747
      %826 = vst [vmem:[#allocation2 + $0x20] sm:$0xff] %v748
      %827 = vst [vmem:[#allocation2 + $0x28] sm:$0xff] %v749
      %828 = vst [vmem:[#allocation2 + $0x30] sm:$0xff] %v750
      %829 = vst [vmem:[#allocation2 + $0x38] sm:$0xff] %v751
      %830 = vst [vmem:[#allocation2 + $0x40] sm:$0xff] %v752
      %831 = vst [vmem:[#allocation2 + $0x48] sm:$0xff] %v753
      %832 = vst [vmem:[#allocation2 + $0x50] sm:$0xff] %v754
      %833 = vst [vmem:[#allocation2 + $0x58] sm:$0xff] %v755
      %834 = vst [vmem:[#allocation2 + $0x60] sm:$0xff] %v756
      %835 = vst [vmem:[#allocation2 + $0x68] sm:$0xff] %v757
      %836 = vst [vmem:[#allocation2 + $0x70] sm:$0xff] %v758
      %837 = vst [vmem:[#allocation2 + $0x78] sm:$0xff] %v759
      %838 = vst [vmem:[#allocation2 + $0x80] sm:$0xff] %v760
      %839 = vst [vmem:[#allocation2 + $0x88] sm:$0xff] %v761
      %840 = vst [vmem:[#allocation2 + $0x90] sm:$0xff] %v762
      %841 = vst [vmem:[#allocation2 + $0x98] sm:$0xff] %v763
      %842 = vst [vmem:[#allocation2 + $0xa0] sm:$0xff] %v764
      %843 = vst [vmem:[#allocation2 + $0xa8] sm:$0xff] %v765
      %844 = vst [vmem:[#allocation2 + $0xb0] sm:$0xff] %v766
      %845 = vst [vmem:[#allocation2 + $0xb8] sm:$0xff] %v767
      %846 = vst [vmem:[#allocation2 + $0xc0] sm:$0xff] %v768
      %847 = vst [vmem:[#allocation2 + $0xc8] sm:$0xff] %v769
      %848 = vst [vmem:[#allocation2 + $0xd0] sm:$0xff] %v770
      %849 = vst [vmem:[#allocation2 + $0xd8] sm:$0xff] %v771
      %850 = vst [vmem:[#allocation2 + $0xe0] sm:$0xff] %v772
      %851 = vst [vmem:[#allocation2 + $0xe8] sm:$0xff] %v773
      %852 = vst [vmem:[#allocation2 + $0xf0] sm:$0xff] %v774
      %853 = vst [vmem:[#allocation2 + $0xf8] sm:$0xff] %v775
      %854 = vst [vmem:[#allocation2 + $0x100] sm:$0xff] %v776
      %855 = vst [vmem:[#allocation2 + $0x108] sm:$0xff] %v777
      %856 = vst [vmem:[#allocation2 + $0x110] sm:$0xff] %v778
      %857 = vst [vmem:[#allocation2 + $0x118] sm:$0xff] %v779
      %858 = vst [vmem:[#allocation2 + $0x120] sm:$0xff] %v780
      %859 = vst [vmem:[#allocation2 + $0x128] sm:$0xff] %v781
      %860 = vst [vmem:[#allocation2 + $0x130] sm:$0xff] %v782
      %861 = vst [vmem:[#allocation2 + $0x138] sm:$0xff] %v783
      %862 = vst [vmem:[#allocation2 + $0x140] sm:$0xff] %v784
      %863 = vst [vmem:[#allocation2 + $0x148] sm:$0xff] %v785
      %864 = vst [vmem:[#allocation2 + $0x150] sm:$0xff] %v786
      %865 = vst [vmem:[#allocation2 + $0x158] sm:$0xff] %v787
      %866 = vst [vmem:[#allocation2 + $0x160] sm:$0xff] %v788
      %867 = vst [vmem:[#allocation2 + $0x168] sm:$0xff] %v789
      %868 = vst [vmem:[#allocation2 + $0x170] sm:$0xff] %v790
      %869 = vst [vmem:[#allocation2 + $0x178] sm:$0xff] %v791
      %870 = vst [vmem:[#allocation2 + $0x180] sm:$0xff] %v792
      %871 = vst [vmem:[#allocation2 + $0x188] sm:$0xff] %v793
      %872 = vst [vmem:[#allocation2 + $0x190] sm:$0xff] %v794
      %873 = vst [vmem:[#allocation2 + $0x198] sm:$0xff] %v795
      %874 = vst [vmem:[#allocation2 + $0x1a0] sm:$0xff] %v796
      %875 = vst [vmem:[#allocation2 + $0x1a8] sm:$0xff] %v797
      %876 = vst [vmem:[#allocation2 + $0x1b0] sm:$0xff] %v798
      %877 = vst [vmem:[#allocation2 + $0x1b8] sm:$0xff] %v799
      %878 = vst [vmem:[#allocation2 + $0x1c0] sm:$0xff] %v800
      %879 = vst [vmem:[#allocation2 + $0x1c8] sm:$0xff] %v801
      %880 = vst [vmem:[#allocation2 + $0x1d0] sm:$0xff] %v802
      %881 = vst [vmem:[#allocation2 + $0x1d8] sm:$0xff] %v803
      %882 = vst [vmem:[#allocation2 + $0x1e0] sm:$0xff] %v804
      %883 = vst [vmem:[#allocation2 + $0x1e8] sm:$0xff] %v805
      %884 = vst [vmem:[#allocation2 + $0x1f0] sm:$0xff] %v806
      %885 = vst [vmem:[#allocation2 + $0x1f8] sm:$0xff] %v807
      %886 = vst [vmem:[#allocation2 + $0x200] sm:$0xff] %v808
      %887 = vst [vmem:[#allocation2 + $0x208] sm:$0xff] %v809
      %888 = vst [vmem:[#allocation2 + $0x210] sm:$0xff] %v810
      %889 = vst [vmem:[#allocation2 + $0x218] sm:$0xff] %v811
      %890 = vst [vmem:[#allocation2 + $0x220] sm:$0xff] %v812
      %891 = vst [vmem:[#allocation2 + $0x228] sm:$0xff] %v813
      %892 = vst [vmem:[#allocation2 + $0x230] sm:$0xff] %v814
      %893 = vst [vmem:[#allocation2 + $0x238] sm:$0xff] %v815
      %894 = vst [vmem:[#allocation2 + $0x240] sm:$0xff] %v816
      %895 = vst [vmem:[#allocation2 + $0x248] sm:$0xff] %v817
      %896 = vst [vmem:[#allocation2 + $0x250] sm:$0xff] %v818
      %897 = vst [vmem:[#allocation2 + $0x258] sm:$0xff] %v819
      %898 = vst [vmem:[#allocation2 + $0x260] sm:$0xff] %v820
      %899 = vst [vmem:[#allocation2 + $0x268] sm:$0xff] %v821
    $region17: #{sanbet_layer.1} parent=1 // pred_fallthru
      _
    // Predicated region
    $region18: #{sanbet_layer.1} parent=1 // pred_check
      %p900 = pneg %p16
    $region19: #{sanbet_layer.1} parent=1 // pred_check_branch
      %902 = sbr.rel (%p900) target = $region21
    $region20: #{sanbet_layer.1} parent=1 // pred_region
      %v903 = vld [vmem:[%s2] sm:$0xff]
      %v904 = vld [vmem:[%s2 + $0x8] sm:$0xff]
      %v905 = vld [vmem:[%s2 + $0x10] sm:$0xff]
      %v906 = vld [vmem:[%s2 + $0x18] sm:$0xff]
      %v907 = vld [vmem:[%s2 + $0x20] sm:$0xff]
      %v908 = vld [vmem:[%s2 + $0x28] sm:$0xff]
      %v909 = vld [vmem:[%s2 + $0x30] sm:$0xff]
      %v910 = vld [vmem:[%s2 + $0x38] sm:$0xff]
      %v911 = vld [vmem:[%s2 + $0x40] sm:$0xff]
      %v912 = vld [vmem:[%s2 + $0x48] sm:$0xff]
      %v913 = vld [vmem:[%s2 + $0x50] sm:$0xff]
      %v914 = vld [vmem:[%s2 + $0x58] sm:$0xff]
      %v915 = vld [vmem:[%s2 + $0x60] sm:$0xff]
      %v916 = vld [vmem:[%s2 + $0x68] sm:$0xff]
      %v917 = vld [vmem:[%s2 + $0x70] sm:$0xff]
      %v918 = vld [vmem:[%s2 + $0x78] sm:$0xff]
      %v919 = vld [vmem:[%s2 + $0x80] sm:$0xff]
      %v920 = vld [vmem:[%s2 + $0x88] sm:$0xff]
      %v921 = vld [vmem:[%s2 + $0x90] sm:$0xff]
      %v922 = vld [vmem:[%s2 + $0x98] sm:$0xff]
      %v923 = vld [vmem:[%s2 + $0xa0] sm:$0xff]
      %v924 = vld [vmem:[%s2 + $0xa8] sm:$0xff]
      %v925 = vld [vmem:[%s2 + $0xb0] sm:$0xff]
      %v926 = vld [vmem:[%s2 + $0xb8] sm:$0xff]
      %v927 = vld [vmem:[%s2 + $0xc0] sm:$0xff]
      %v928 = vld [vmem:[%s2 + $0xc8] sm:$0xff]
      %v929 = vld [vmem:[%s2 + $0xd0] sm:$0xff]
      %v930 = vld [vmem:[%s2 + $0xd8] sm:$0xff]
      %v931 = vld [vmem:[%s2 + $0xe0] sm:$0xff]
      %v932 = vld [vmem:[%s2 + $0xe8] sm:$0xff]
      %v933 = vld [vmem:[%s2 + $0xf0] sm:$0xff]
      %v934 = vld [vmem:[%s2 + $0xf8] sm:$0xff]
      %v935 = vld [vmem:[%s2 + $0x100] sm:$0xff]
      %v936 = vld [vmem:[%s2 + $0x108] sm:$0xff]
      %v937 = vld [vmem:[%s2 + $0x110] sm:$0xff]
      %v938 = vld [vmem:[%s2 + $0x118] sm:$0xff]
      %v939 = vld [vmem:[%s2 + $0x120] sm:$0xff]
      %v940 = vld [vmem:[%s2 + $0x128] sm:$0xff]
      %v941 = vld [vmem:[%s2 + $0x130] sm:$0xff]
      %v942 = vld [vmem:[%s2 + $0x138] sm:$0xff]
      %v943 = vld [vmem:[%s2 + $0x140] sm:$0xff]
      %v944 = vld [vmem:[%s2 + $0x148] sm:$0xff]
      %v945 = vld [vmem:[%s2 + $0x150] sm:$0xff]
      %v946 = vld [vmem:[%s2 + $0x158] sm:$0xff]
      %v947 = vld [vmem:[%s2 + $0x160] sm:$0xff]
      %v948 = vld [vmem:[%s2 + $0x168] sm:$0xff]
      %v949 = vld [vmem:[%s2 + $0x170] sm:$0xff]
      %v950 = vld [vmem:[%s2 + $0x178] sm:$0xff]
      %v951 = vld [vmem:[%s2 + $0x180] sm:$0xff]
      %v952 = vld [vmem:[%s2 + $0x188] sm:$0xff]
      %v953 = vld [vmem:[%s2 + $0x190] sm:$0xff]
      %v954 = vld [vmem:[%s2 + $0x198] sm:$0xff]
      %v955 = vld [vmem:[%s3] sm:$0xff]
      %v956 = vld [vmem:[%s3 + $0x8] sm:$0xff]
      %v957 = vld [vmem:[%s3 + $0x10] sm:$0xff]
      %v958 = vld [vmem:[%s3 + $0x18] sm:$0xff]
      %v959 = vld [vmem:[%s3 + $0x20] sm:$0xff]
      %v960 = vld [vmem:[%s3 + $0x28] sm:$0xff]
      %v961 = vld [vmem:[%s3 + $0x30] sm:$0xff]
      %v962 = vld [vmem:[%s3 + $0x38] sm:$0xff]
      %v963 = vld [vmem:[%s3 + $0x40] sm:$0xff]
      %v964 = vld [vmem:[%s3 + $0x48] sm:$0xff]
      %v965 = vld [vmem:[%s3 + $0x50] sm:$0xff]
      %v966 = vld [vmem:[%s3 + $0x58] sm:$0xff]
      %v967 = vld [vmem:[%s3 + $0x60] sm:$0xff]
      %v968 = vld [vmem:[%s3 + $0x68] sm:$0xff]
      %v969 = vld [vmem:[%s3 + $0x70] sm:$0xff]
      %v970 = vld [vmem:[%s3 + $0x78] sm:$0xff]
      %v971 = vld [vmem:[%s3 + $0x80] sm:$0xff]
      %v972 = vld [vmem:[%s3 + $0x88] sm:$0xff]
      %v973 = vld [vmem:[%s3 + $0x90] sm:$0xff]
      %v974 = vld [vmem:[%s3 + $0x98] sm:$0xff]
      %v975 = vld [vmem:[%s3 + $0xa0] sm:$0xff]
      %v976 = vld [vmem:[%s3 + $0xa8] sm:$0xff]
      %v977 = vld [vmem:[%s3 + $0xb0] sm:$0xff]
      %v978 = vld [vmem:[%s3 + $0xb8] sm:$0xff]
      %v979 = vld [vmem:[%s3 + $0xc0] sm:$0xff]
      %v980 = vld [vmem:[%s3 + $0xc8] sm:$0xff]
      %v981 = vld [vmem:[%s3 + $0xd0] sm:$0xff]
      %v982 = vld [vmem:[%s3 + $0xd8] sm:$0xff]
      %v983 = vld [vmem:[%s3 + $0xe0] sm:$0xff]
      %v984 = vld [vmem:[%s3 + $0xe8] sm:$0xff]
      %v985 = vld [vmem:[%s3 + $0xf0] sm:$0xff]
      %v986 = vld [vmem:[%s3 + $0xf8] sm:$0xff]
      %v987 = vld [vmem:[%s3 + $0x100] sm:$0xff]
      %v988 = vld [vmem:[%s3 + $0x108] sm:$0xff]
      %v989 = vld [vmem:[%s3 + $0x110] sm:$0xff]
      %v990 = vld [vmem:[%s3 + $0x118] sm:$0xff]
      %v991 = vld [vmem:[%s3 + $0x120] sm:$0xff]
      %v992 = vld [vmem:[%s3 + $0x128] sm:$0xff]
      %v993 = vld [vmem:[%s3 + $0x130] sm:$0xff]
      %v994 = vld [vmem:[%s3 + $0x138] sm:$0xff]
      %v995 = vld [vmem:[%s3 + $0x140] sm:$0xff]
      %v996 = vld [vmem:[%s3 + $0x148] sm:$0xff]
      %v997 = vld [vmem:[%s3 + $0x150] sm:$0xff]
      %v998 = vld [vmem:[%s3 + $0x158] sm:$0xff]
      %v999 = vld [vmem:[%s3 + $0x160] sm:$0xff]
      %v1000 = vld [vmem:[%s3 + $0x168] sm:$0xff]
      %v1001 = vld [vmem:[%s3 + $0x170] sm:$0xff]
      %v1002 = vld [vmem:[%s3 + $0x178] sm:$0xff]
      %v1003 = vld [vmem:[%s3 + $0x180] sm:$0xff]
      %v1004 = vld [vmem:[%s3 + $0x188] sm:$0xff]
      %v1005 = vld [vmem:[%s3 + $0x190] sm:$0xff]
      %v1006 = vld [vmem:[%s3 + $0x198] sm:$0xff]
      %v1007 = vld [vmem:[%s3 + $0x1a0] sm:$0xff]
      %v1008 = vld [vmem:[%s3 + $0x1a8] sm:$0xff]
      %v1009 = vld [vmem:[%s3 + $0x1b0] sm:$0xff]
      %v1010 = vld [vmem:[%s3 + $0x1b8] sm:$0xff]
      %v1011 = vld [vmem:[%s3 + $0x1c0] sm:$0xff]
      %v1012 = vld [vmem:[%s3 + $0x1c8] sm:$0xff]
      %v1013 = vld [vmem:[%s3 + $0x1d0] sm:$0xff]
      %v1014 = vld [vmem:[%s3 + $0x1d8] sm:$0xff]
      %v1015 = vld [vmem:[%s3 + $0x1e0] sm:$0xff]
      %v1016 = vld [vmem:[%s3 + $0x1e8] sm:$0xff]
      %v1017 = vld [vmem:[%s3 + $0x1f0] sm:$0xff]
      %v1018 = vld [vmem:[%s3 + $0x1f8] sm:$0xff]
      %v1019 = vld [vmem:[%s3 + $0x200] sm:$0xff]
      %v1020 = vld [vmem:[%s3 + $0x208] sm:$0xff]
      %v1021 = vld [vmem:[%s3 + $0x210] sm:$0xff]
      %v1022 = vld [vmem:[%s3 + $0x218] sm:$0xff]
      %v1023 = vld [vmem:[%s3 + $0x220] sm:$0xff]
      %v1024 = vld [vmem:[%s3 + $0x228] sm:$0xff]
      %v1025 = vld [vmem:[%s3 + $0x230] sm:$0xff]
      %v1026 = vld [vmem:[%s3 + $0x238] sm:$0xff]
      %v1027 = vld [vmem:[%s3 + $0x240] sm:$0xff]
      %v1028 = vld [vmem:[%s3 + $0x248] sm:$0xff]
      %v1029 = vld [vmem:[%s3 + $0x250] sm:$0xff]
      %v1030 = vld [vmem:[%s3 + $0x258] sm:$0xff]
      %v1031 = vld [vmem:[%s3 + $0x260] sm:$0xff]
      %v1032 = vld [vmem:[%s3 + $0x268] sm:$0xff]
      %v1033 = vld [vmem:[%s3 + $0x270] sm:$0xff]
      %v1034 = vld [vmem:[%s3 + $0x278] sm:$0xff]
      %v1035 = vld [vmem:[%s3 + $0x280] sm:$0xff]
      %v1036 = vld [vmem:[%s3 + $0x288] sm:$0xff]
      %v1037 = vld [vmem:[%s3 + $0x290] sm:$0xff]
      %v1038 = vld [vmem:[%s3 + $0x298] sm:$0xff]
      %v1039 = vld [vmem:[%s3 + $0x2a0] sm:$0xff]
      %v1040 = vld [vmem:[%s3 + $0x2a8] sm:$0xff]
      %v1041 = vld [vmem:[%s3 + $0x2b0] sm:$0xff]
      %v1042 = vld [vmem:[%s3 + $0x2b8] sm:$0xff]
      %v1043 = vld [vmem:[%s3 + $0x2c0] sm:$0xff]
      %v1044 = vld [vmem:[%s3 + $0x2c8] sm:$0xff]
      %v1045 = vld [vmem:[%s3 + $0x2d0] sm:$0xff]
      %v1046 = vld [vmem:[%s3 + $0x2d8] sm:$0xff]
      %v1047 = vld [vmem:[%s3 + $0x2e0] sm:$0xff]
      %v1048 = vld [vmem:[%s3 + $0x2e8] sm:$0xff]
      %v1049 = vld [vmem:[%s3 + $0x2f0] sm:$0xff]
      %v1050 = vld [vmem:[%s3 + $0x2f8] sm:$0xff]
      %v1051 = vlaneseq
      %v1052 = vand.u32 %v1051, 127
      %v1053 = vadd.s32 %v1052, 128
      %v1054 = vlaneseq
      %v1055 = vshrl.u32 %v1054, 7
      %v1056 = vadd.s32 %v1055, 8
      %v1057 = vadd.s32 %v1055, 16
      %v1058 = vadd.s32 %v1055, 24
      %v1059 = vadd.s32 %v1055, 32
      %v1060 = vadd.s32 %v1055, 40
      %v1061 = vadd.s32 %v1055, 48
      %v1062 = vadd.s32 %v1055, 56
      %v1063 = vadd.s32 %v1055, 64
      %v1064 = vadd.s32 %v1055, 72
      %v1065 = vadd.s32 %v1055, 80
      %v1066 = vadd.s32 %v1055, 88
      %v1067 = vadd.s32 %v1055, 96
      %v1068 = vadd.s32 %v1055, 104
      %v1069 = vadd.s32 %v1055, 112
      %v1070 = vadd.s32 %v1055, 120
      %v1071 = vadd.s32 %v1055, 128
      %v1072 = vadd.s32 %v1055, 136
      %v1073 = vadd.s32 %v1055, 144
      %v1074 = vadd.s32 %v1055, 152
      %v1075 = vadd.s32 %v1055, 160
      %v1076 = vadd.s32 %v1055, 168
      %v1077 = vadd.s32 %v1055, 176
      %v1078 = vadd.s32 %v1055, 184
      %v1079 = vadd.s32 %v1055, 192
      %v1080 = vadd.s32 %v1055, 200
      %v1081 = vadd.s32 %v1055, 208
      %v1082 = vadd.s32 %v1055, 216
      %v1083 = vadd.s32 %v1055, 224
      %v1084 = vadd.s32 %v1055, 232
      %v1085 = vadd.s32 %v1055, 240
      %v1086 = vadd.s32 %v1055, 248
      %vm1087 = vcmp.lt.s32.totalorder %v1052, 192
      %vm1088 = vcmp.lt.s32.totalorder %v1053, 192
      %v1089 = vsel %vm1087, %v903, 0.0
      %v1090 = vsel %vm1088, %v904, 0.0
      %v1091 = vsel %vm1087, %v905, 0.0
      %v1092 = vsel %vm1088, %v906, 0.0
      %v1093 = vsel %vm1087, %v907, 0.0
      %v1094 = vsel %vm1088, %v908, 0.0
      %v1095 = vsel %vm1087, %v909, 0.0
      %v1096 = vsel %vm1088, %v910, 0.0
      %v1097 = vsel %vm1087, %v911, 0.0
      %v1098 = vsel %vm1088, %v912, 0.0
      %v1099 = vsel %vm1087, %v913, 0.0
      %v1100 = vsel %vm1088, %v914, 0.0
      %v1101 = vsel %vm1087, %v915, 0.0
      %v1102 = vsel %vm1088, %v916, 0.0
      %v1103 = vsel %vm1087, %v917, 0.0
      %v1104 = vsel %vm1088, %v918, 0.0
      %v1105 = vsel %vm1087, %v919, 0.0
      %v1106 = vsel %vm1088, %v920, 0.0
      %v1107 = vsel %vm1087, %v921, 0.0
      %v1108 = vsel %vm1088, %v922, 0.0
      %v1109 = vsel %vm1087, %v923, 0.0
      %v1110 = vsel %vm1088, %v924, 0.0
      %v1111 = vsel %vm1087, %v925, 0.0
      %v1112 = vsel %vm1088, %v926, 0.0
      %v1113 = vsel %vm1087, %v927, 0.0
      %v1114 = vsel %vm1088, %v928, 0.0
      %v1115 = vsel %vm1087, %v929, 0.0
      %v1116 = vsel %vm1088, %v930, 0.0
      %v1117 = vsel %vm1087, %v931, 0.0
      %v1118 = vsel %vm1088, %v932, 0.0
      %v1119 = vsel %vm1087, %v933, 0.0
      %v1120 = vsel %vm1088, %v934, 0.0
      %v1121 = vsel %vm1087, %v935, 0.0
      %v1122 = vsel %vm1088, %v936, 0.0
      %v1123 = vsel %vm1087, %v937, 0.0
      %v1124 = vsel %vm1088, %v938, 0.0
      %v1125 = vsel %vm1087, %v939, 0.0
      %v1126 = vsel %vm1088, %v940, 0.0
      %v1127 = vsel %vm1087, %v941, 0.0
      %v1128 = vsel %vm1088, %v942, 0.0
      %v1129 = vsel %vm1087, %v943, 0.0
      %v1130 = vsel %vm1088, %v944, 0.0
      %v1131 = vsel %vm1087, %v945, 0.0
      %v1132 = vsel %vm1088, %v946, 0.0
      %v1133 = vsel %vm1087, %v947, 0.0
      %v1134 = vsel %vm1088, %v948, 0.0
      %v1135 = vsel %vm1087, %v949, 0.0
      %v1136 = vsel %vm1088, %v950, 0.0
      %v1137 = vsel %vm1087, %v951, 0.0
      %v1138 = vsel %vm1088, %v952, 0.0
      %v1139 = vsel %vm1087, %v953, 0.0
      %v1140 = vsel %vm1088, %v954, 0.0
      %vm1141 = vcmp.lt.s32.totalorder %v1055, 192
      %vm1142 = vcmp.lt.s32.totalorder %v1056, 192
      %vm1143 = vcmp.lt.s32.totalorder %v1057, 192
      %vm1144 = vcmp.lt.s32.totalorder %v1058, 192
      %vm1145 = vcmp.lt.s32.totalorder %v1059, 192
      %vm1146 = vcmp.lt.s32.totalorder %v1060, 192
      %vm1147 = vcmp.lt.s32.totalorder %v1061, 192
      %vm1148 = vcmp.lt.s32.totalorder %v1062, 192
      %vm1149 = vcmp.lt.s32.totalorder %v1063, 192
      %vm1150 = vcmp.lt.s32.totalorder %v1064, 192
      %vm1151 = vcmp.lt.s32.totalorder %v1065, 192
      %vm1152 = vcmp.lt.s32.totalorder %v1066, 192
      %vm1153 = vcmp.lt.s32.totalorder %v1067, 192
      %vm1154 = vcmp.lt.s32.totalorder %v1068, 192
      %vm1155 = vcmp.lt.s32.totalorder %v1069, 192
      %vm1156 = vcmp.lt.s32.totalorder %v1070, 192
      %vm1157 = vcmp.lt.s32.totalorder %v1071, 192
      %vm1158 = vcmp.lt.s32.totalorder %v1072, 192
      %vm1159 = vcmp.lt.s32.totalorder %v1073, 192
      %vm1160 = vcmp.lt.s32.totalorder %v1074, 192
      %vm1161 = vcmp.lt.s32.totalorder %v1075, 192
      %vm1162 = vcmp.lt.s32.totalorder %v1076, 192
      %vm1163 = vcmp.lt.s32.totalorder %v1077, 192
      %vm1164 = vcmp.lt.s32.totalorder %v1078, 192
      %vm1165 = vcmp.lt.s32.totalorder %v1079, 192
      %vm1166 = vcmp.lt.s32.totalorder %v1080, 192
      %vm1167 = vcmp.lt.s32.totalorder %v1081, 192
      %vm1168 = vcmp.lt.s32.totalorder %v1082, 192
      %vm1169 = vcmp.lt.s32.totalorder %v1083, 192
      %vm1170 = vcmp.lt.s32.totalorder %v1084, 192
      %vm1171 = vcmp.lt.s32.totalorder %v1085, 192
      %vm1172 = vcmp.lt.s32.totalorder %v1086, 192
      %v1173 = vsel %vm1141, %v955, 0.0
      %v1174 = vsel %vm1141, %v956, 0.0
      %v1175 = vsel %vm1141, %v957, 0.0
      %v1176 = vsel %vm1142, %v958, 0.0
      %v1177 = vsel %vm1142, %v959, 0.0
      %v1178 = vsel %vm1142, %v960, 0.0
      %v1179 = vsel %vm1143, %v961, 0.0
      %v1180 = vsel %vm1143, %v962, 0.0
      %v1181 = vsel %vm1143, %v963, 0.0
      %v1182 = vsel %vm1144, %v964, 0.0
      %v1183 = vsel %vm1144, %v965, 0.0
      %v1184 = vsel %vm1144, %v966, 0.0
      %v1185 = vsel %vm1145, %v967, 0.0
      %v1186 = vsel %vm1145, %v968, 0.0
      %v1187 = vsel %vm1145, %v969, 0.0
      %v1188 = vsel %vm1146, %v970, 0.0
      %v1189 = vsel %vm1146, %v971, 0.0
      %v1190 = vsel %vm1146, %v972, 0.0
      %v1191 = vsel %vm1147, %v973, 0.0
      %v1192 = vsel %vm1147, %v974, 0.0
      %v1193 = vsel %vm1147, %v975, 0.0
      %v1194 = vsel %vm1148, %v976, 0.0
      %v1195 = vsel %vm1148, %v977, 0.0
      %v1196 = vsel %vm1148, %v978, 0.0
      %v1197 = vsel %vm1149, %v979, 0.0
      %v1198 = vsel %vm1149, %v980, 0.0
      %v1199 = vsel %vm1149, %v981, 0.0
      %v1200 = vsel %vm1150, %v982, 0.0
      %v1201 = vsel %vm1150, %v983, 0.0
      %v1202 = vsel %vm1150, %v984, 0.0
      %v1203 = vsel %vm1151, %v985, 0.0
      %v1204 = vsel %vm1151, %v986, 0.0
      %v1205 = vsel %vm1151, %v987, 0.0
      %v1206 = vsel %vm1152, %v988, 0.0
      %v1207 = vsel %vm1152, %v989, 0.0
      %v1208 = vsel %vm1152, %v990, 0.0
      %v1209 = vsel %vm1153, %v991, 0.0
      %v1210 = vsel %vm1153, %v992, 0.0
      %v1211 = vsel %vm1153, %v993, 0.0
      %v1212 = vsel %vm1154, %v994, 0.0
      %v1213 = vsel %vm1154, %v995, 0.0
      %v1214 = vsel %vm1154, %v996, 0.0
      %v1215 = vsel %vm1155, %v997, 0.0
      %v1216 = vsel %vm1155, %v998, 0.0
      %v1217 = vsel %vm1155, %v999, 0.0
      %v1218 = vsel %vm1156, %v1000, 0.0
      %v1219 = vsel %vm1156, %v1001, 0.0
      %v1220 = vsel %vm1156, %v1002, 0.0
      %v1221 = vsel %vm1157, %v1003, 0.0
      %v1222 = vsel %vm1157, %v1004, 0.0
      %v1223 = vsel %vm1157, %v1005, 0.0
      %v1224 = vsel %vm1158, %v1006, 0.0
      %v1225 = vsel %vm1158, %v1007, 0.0
      %v1226 = vsel %vm1158, %v1008, 0.0
      %v1227 = vsel %vm1159, %v1009, 0.0
      %v1228 = vsel %vm1159, %v1010, 0.0
      %v1229 = vsel %vm1159, %v1011, 0.0
      %v1230 = vsel %vm1160, %v1012, 0.0
      %v1231 = vsel %vm1160, %v1013, 0.0
      %v1232 = vsel %vm1160, %v1014, 0.0
      %v1233 = vsel %vm1161, %v1015, 0.0
      %v1234 = vsel %vm1161, %v1016, 0.0
      %v1235 = vsel %vm1161, %v1017, 0.0
      %v1236 = vsel %vm1162, %v1018, 0.0
      %v1237 = vsel %vm1162, %v1019, 0.0
      %v1238 = vsel %vm1162, %v1020, 0.0
      %v1239 = vsel %vm1163, %v1021, 0.0
      %v1240 = vsel %vm1163, %v1022, 0.0
      %v1241 = vsel %vm1163, %v1023, 0.0
      %v1242 = vsel %vm1164, %v1024, 0.0
      %v1243 = vsel %vm1164, %v1025, 0.0
      %v1244 = vsel %vm1164, %v1026, 0.0
      %v1245 = vsel %vm1165, %v1027, 0.0
      %v1246 = vsel %vm1165, %v1028, 0.0
      %v1247 = vsel %vm1165, %v1029, 0.0
      %v1248 = vsel %vm1166, %v1030, 0.0
      %v1249 = vsel %vm1166, %v1031, 0.0
      %v1250 = vsel %vm1166, %v1032, 0.0
      %v1251 = vsel %vm1167, %v1033, 0.0
      %v1252 = vsel %vm1167, %v1034, 0.0
      %v1253 = vsel %vm1167, %v1035, 0.0
      %v1254 = vsel %vm1168, %v1036, 0.0
      %v1255 = vsel %vm1168, %v1037, 0.0
      %v1256 = vsel %vm1168, %v1038, 0.0
      %v1257 = vsel %vm1169, %v1039, 0.0
      %v1258 = vsel %vm1169, %v1040, 0.0
      %v1259 = vsel %vm1169, %v1041, 0.0
      %v1260 = vsel %vm1170, %v1042, 0.0
      %v1261 = vsel %vm1170, %v1043, 0.0
      %v1262 = vsel %vm1170, %v1044, 0.0
      %v1263 = vsel %vm1171, %v1045, 0.0
      %v1264 = vsel %vm1171, %v1046, 0.0
      %v1265 = vsel %vm1171, %v1047, 0.0
      %v1266 = vsel %vm1172, %v1048, 0.0
      %v1267 = vsel %vm1172, %v1049, 0.0
      %v1268 = vsel %vm1172, %v1050, 0.0
      %v1269 = vld [vmem:[#allocation2] sm:$0xff]
      %v1270 = vld [vmem:[#allocation2 + $0x8] sm:$0xff]
      %v1271 = vld [vmem:[#allocation2 + $0x10] sm:$0xff]
      %v1272 = vld [vmem:[#allocation2 + $0x18] sm:$0xff]
      %v1273 = vld [vmem:[#allocation2 + $0x20] sm:$0xff]
      %v1274 = vld [vmem:[#allocation2 + $0x28] sm:$0xff]
      %v1275 = vld [vmem:[#allocation2 + $0x30] sm:$0xff]
      %v1276 = vld [vmem:[#allocation2 + $0x38] sm:$0xff]
      %v1277 = vld [vmem:[#allocation2 + $0x40] sm:$0xff]
      %v1278 = vld [vmem:[#allocation2 + $0x48] sm:$0xff]
      %v1279 = vld [vmem:[#allocation2 + $0x50] sm:$0xff]
      %v1280 = vld [vmem:[#allocation2 + $0x58] sm:$0xff]
      %v1281 = vld [vmem:[#allocation2 + $0x60] sm:$0xff]
      %v1282 = vld [vmem:[#allocation2 + $0x68] sm:$0xff]
      %v1283 = vld [vmem:[#allocation2 + $0x70] sm:$0xff]
      %v1284 = vld [vmem:[#allocation2 + $0x78] sm:$0xff]
      %v1285 = vld [vmem:[#allocation2 + $0x80] sm:$0xff]
      %v1286 = vld [vmem:[#allocation2 + $0x88] sm:$0xff]
      %v1287 = vld [vmem:[#allocation2 + $0x90] sm:$0xff]
      %v1288 = vld [vmem:[#allocation2 + $0x98] sm:$0xff]
      %v1289 = vld [vmem:[#allocation2 + $0xa0] sm:$0xff]
      %v1290 = vld [vmem:[#allocation2 + $0xa8] sm:$0xff]
      %v1291 = vld [vmem:[#allocation2 + $0xb0] sm:$0xff]
      %v1292 = vld [vmem:[#allocation2 + $0xb8] sm:$0xff]
      %v1293 = vld [vmem:[#allocation2 + $0xc0] sm:$0xff]
      %v1294 = vld [vmem:[#allocation2 + $0xc8] sm:$0xff]
      %v1295 = vld [vmem:[#allocation2 + $0xd0] sm:$0xff]
      %v1296 = vld [vmem:[#allocation2 + $0xd8] sm:$0xff]
      %v1297 = vld [vmem:[#allocation2 + $0xe0] sm:$0xff]
      %v1298 = vld [vmem:[#allocation2 + $0xe8] sm:$0xff]
      %v1299 = vld [vmem:[#allocation2 + $0xf0] sm:$0xff]
      %v1300 = vld [vmem:[#allocation2 + $0xf8] sm:$0xff]
      %v1301 = vld [vmem:[#allocation2 + $0x100] sm:$0xff]
      %v1302 = vld [vmem:[#allocation2 + $0x108] sm:$0xff]
      %v1303 = vld [vmem:[#allocation2 + $0x110] sm:$0xff]
      %v1304 = vld [vmem:[#allocation2 + $0x118] sm:$0xff]
      %v1305 = vld [vmem:[#allocation2 + $0x120] sm:$0xff]
      %v1306 = vld [vmem:[#allocation2 + $0x128] sm:$0xff]
      %v1307 = vld [vmem:[#allocation2 + $0x130] sm:$0xff]
      %v1308 = vld [vmem:[#allocation2 + $0x138] sm:$0xff]
      %v1309 = vld [vmem:[#allocation2 + $0x140] sm:$0xff]
      %v1310 = vld [vmem:[#allocation2 + $0x148] sm:$0xff]
      %v1311 = vld [vmem:[#allocation2 + $0x150] sm:$0xff]
      %v1312 = vld [vmem:[#allocation2 + $0x158] sm:$0xff]
      %v1313 = vld [vmem:[#allocation2 + $0x160] sm:$0xff]
      %v1314 = vld [vmem:[#allocation2 + $0x168] sm:$0xff]
      %v1315 = vld [vmem:[#allocation2 + $0x170] sm:$0xff]
      %v1316 = vld [vmem:[#allocation2 + $0x178] sm:$0xff]
      %v1317 = vld [vmem:[#allocation2 + $0x180] sm:$0xff]
      %v1318 = vld [vmem:[#allocation2 + $0x188] sm:$0xff]
      %v1319 = vld [vmem:[#allocation2 + $0x190] sm:$0xff]
      %v1320 = vld [vmem:[#allocation2 + $0x198] sm:$0xff]
      %v1321 = vld [vmem:[#allocation2 + $0x1a0] sm:$0xff]
      %v1322 = vld [vmem:[#allocation2 + $0x1a8] sm:$0xff]
      %v1323 = vld [vmem:[#allocation2 + $0x1b0] sm:$0xff]
      %v1324 = vld [vmem:[#allocation2 + $0x1b8] sm:$0xff]
      %v1325 = vld [vmem:[#allocation2 + $0x1c0] sm:$0xff]
      %v1326 = vld [vmem:[#allocation2 + $0x1c8] sm:$0xff]
      %v1327 = vld [vmem:[#allocation2 + $0x1d0] sm:$0xff]
      %v1328 = vld [vmem:[#allocation2 + $0x1d8] sm:$0xff]
      %v1329 = vld [vmem:[#allocation2 + $0x1e0] sm:$0xff]
      %v1330 = vld [vmem:[#allocation2 + $0x1e8] sm:$0xff]
      %v1331 = vld [vmem:[#allocation2 + $0x1f0] sm:$0xff]
      %v1332 = vld [vmem:[#allocation2 + $0x1f8] sm:$0xff]
      %v1333 = vld [vmem:[#allocation2 + $0x200] sm:$0xff]
      %v1334 = vld [vmem:[#allocation2 + $0x208] sm:$0xff]
      %v1335 = vld [vmem:[#allocation2 + $0x210] sm:$0xff]
      %v1336 = vld [vmem:[#allocation2 + $0x218] sm:$0xff]
      %v1337 = vld [vmem:[#allocation2 + $0x220] sm:$0xff]
      %v1338 = vld [vmem:[#allocation2 + $0x228] sm:$0xff]
      %v1339 = vld [vmem:[#allocation2 + $0x230] sm:$0xff]
      %v1340 = vld [vmem:[#allocation2 + $0x238] sm:$0xff]
      %v1341 = vld [vmem:[#allocation2 + $0x240] sm:$0xff]
      %v1342 = vld [vmem:[#allocation2 + $0x248] sm:$0xff]
      %v1343 = vld [vmem:[#allocation2 + $0x250] sm:$0xff]
      %v1344 = vld [vmem:[#allocation2 + $0x258] sm:$0xff]
      %v1345 = vld [vmem:[#allocation2 + $0x260] sm:$0xff]
      %v1346 = vld [vmem:[#allocation2 + $0x268] sm:$0xff]
      %1347 = vmatprep.subr.mxu0 %v1174
      %1348 = vmatpush1.msra.mxu0 %v1173
      %1349 = vmatprep.subr.mxu0 %v1177
      %1350 = vmatpush1.msra.mxu0 %v1176
      %1351 = vmatprep.subr.mxu0 %v1180
      %1352 = vmatpush1.msra.mxu0 %v1179
      %1353 = vmatprep.subr.mxu0 %v1183
      %1354 = vmatpush1.msra.mxu0 %v1182
      %1355 = vmatprep.subr.mxu0 %v1186
      %1356 = vmatpush1.msra.mxu0 %v1185
      %1357 = vmatprep.subr.mxu0 %v1189
      %1358 = vmatpush1.msra.mxu0 %v1188
      %1359 = vmatprep.subr.mxu0 %v1192
      %1360 = vmatpush1.msra.mxu0 %v1191
      %1361 = vmatprep.subr.mxu0 %v1195
      %1362 = vmatpush1.msra.mxu0 %v1194
      %1363 = vmatprep.subr.mxu0 %v1198
      %1364 = vmatpush1.msra.mxu0 %v1197
      %1365 = vmatprep.subr.mxu0 %v1201
      %1366 = vmatpush1.msra.mxu0 %v1200
      %1367 = vmatprep.subr.mxu0 %v1204
      %1368 = vmatpush1.msra.mxu0 %v1203
      %1369 = vmatprep.subr.mxu0 %v1207
      %1370 = vmatpush1.msra.mxu0 %v1206
      %1371 = vmatprep.subr.mxu0 %v1210
      %1372 = vmatpush1.msra.mxu0 %v1209
      %1373 = vmatprep.subr.mxu0 %v1213
      %1374 = vmatpush1.msra.mxu0 %v1212
      %1375 = vmatprep.subr.mxu0 %v1216
      %1376 = vmatpush1.msra.mxu0 %v1215
      %1377 = vmatprep.subr.mxu0 %v1219
      %1378 = vmatpush1.msra.mxu0 %v1218
      %1379 = vmatprep.subr.mxu0 %v1222
      %1380 = vmatpush1.msra.mxu0 %v1221
      %1381 = vmatprep.subr.mxu0 %v1225
      %1382 = vmatpush1.msra.mxu0 %v1224
      %1383 = vmatprep.subr.mxu0 %v1228
      %1384 = vmatpush1.msra.mxu0 %v1227
      %1385 = vmatprep.subr.mxu0 %v1231
      %1386 = vmatpush1.msra.mxu0 %v1230
      %1387 = vmatprep.subr.mxu0 %v1234
      %1388 = vmatpush1.msra.mxu0 %v1233
      %1389 = vmatprep.subr.mxu0 %v1237
      %1390 = vmatpush1.msra.mxu0 %v1236
      %1391 = vmatprep.subr.mxu0 %v1240
      %1392 = vmatpush1.msra.mxu0 %v1239
      %1393 = vmatprep.subr.mxu0 %v1243
      %1394 = vmatpush1.msra.mxu0 %v1242
      %1395 = vmatprep.subr.mxu0 %v1246
      %1396 = vmatpush1.msra.mxu0 %v1245
      %1397 = vmatprep.subr.mxu0 %v1249
      %1398 = vmatpush1.msra.mxu0 %v1248
      %1399 = vmatprep.subr.mxu0 %v1252
      %1400 = vmatpush1.msra.mxu0 %v1251
      %1401 = vmatprep.subr.mxu0 %v1255
      %1402 = vmatpush1.msra.mxu0 %v1254
      %1403 = vmatprep.subr.mxu0 %v1258
      %1404 = vmatpush1.msra.mxu0 %v1257
      %1405 = vmatprep.subr.mxu0 %v1261
      %1406 = vmatpush1.msra.mxu0 %v1260
      %1407 = vmatprep.subr.mxu0 %v1264
      %1408 = vmatpush1.msra.mxu0 %v1263
      %1409 = vmatprep.subr.mxu0 %v1267
      %1410 = vmatpush1.msra.mxu0 %v1266
      %1411 = vmatprep.mubr.f32.mxu0 %v1090
      %1412 = vmatmul.mubr.f32.gmra.mrb[0].mxu0 %v1089
      %v1413 = vpop.f32.mrb[0].mxu0
      %v1414 = vadd.f32 0.0, %v1413
      %v1415 = vpop.f32.mrb[0].mxu0
      %v1416 = vadd.f32 0.0, %v1415
      %1417 = vmatprep.mubr.f32.mxu0 %v1092
      %1418 = vmatmul.mubr.f32.gmra.mrb[0].mxu0 %v1091
      %v1419 = vpop.f32.mrb[0].mxu0
      %v1420 = vadd.f32 0.0, %v1419
      %v1421 = vpop.f32.mrb[0].mxu0
      %v1422 = vadd.f32 0.0, %v1421
      %1423 = vmatprep.mubr.f32.mxu0 %v1094
      %1424 = vmatmul.mubr.f32.gmra.mrb[0].mxu0 %v1093
      %v1425 = vpop.f32.mrb[0].mxu0
      %v1426 = vadd.f32 0.0, %v1425
      %v1427 = vpop.f32.mrb[0].mxu0
      %v1428 = vadd.f32 0.0, %v1427
      %1429 = vmatprep.mubr.f32.mxu0 %v1096
      %1430 = vmatmul.mubr.f32.gmra.mrb[0].mxu0 %v1095
      %v1431 = vpop.f32.mrb[0].mxu0
      %v1432 = vadd.f32 0.0, %v1431
      %v1433 = vpop.f32.mrb[0].mxu0
      %v1434 = vadd.f32 0.0, %v1433
      %1435 = vmatprep.mubr.f32.mxu0 %v1098
      %1436 = vmatmul.mubr.f32.gmra.mrb[0].mxu0 %v1097
      %v1437 = vpop.f32.mrb[0].mxu0
      %v1438 = vadd.f32 0.0, %v1437
      %v1439 = vpop.f32.mrb[0].mxu0
      %v1440 = vadd.f32 0.0, %v1439
      %1441 = vmatprep.mubr.f32.mxu0 %v1100
      %1442 = vmatmul.mubr.f32.gmra.mrb[0].mxu0 %v1099
      %v1443 = vpop.f32.mrb[0].mxu0
      %v1444 = vadd.f32 0.0, %v1443
      %v1445 = vpop.f32.mrb[0].mxu0
      %v1446 = vadd.f32 0.0, %v1445
      %1447 = vmatprep.mubr.f32.mxu0 %v1102
      %1448 = vmatmul.mubr.f32.gmra.mrb[0].mxu0 %v1101
      %v1449 = vpop.f32.mrb[0].mxu0
      %v1450 = vadd.f32 0.0, %v1449
      %v1451 = vpop.f32.mrb[0].mxu0
      %v1452 = vadd.f32 0.0, %v1451
      %1453 = vmatprep.mubr.f32.mxu0 %v1104
      %1454 = vmatmul.mubr.f32.gmra.mrb[0].mxu0 %v1103
      %v1455 = vpop.f32.mrb[0].mxu0
      %v1456 = vadd.f32 0.0, %v1455
      %v1457 = vpop.f32.mrb[0].mxu0
      %v1458 = vadd.f32 0.0, %v1457
      %1459 = vmatprep.mubr.f32.mxu0 %v1106
      %1460 = vmatmul.mubr.f32.gmra.mrb[0].mxu0 %v1105
      %v1461 = vpop.f32.mrb[0].mxu0
      %v1462 = vadd.f32 0.0, %v1461
      %v1463 = vpop.f32.mrb[0].mxu0
      %v1464 = vadd.f32 0.0, %v1463
      %1465 = vmatprep.mubr.f32.mxu0 %v1108
      %1466 = vmatmul.mubr.f32.gmra.mrb[0].mxu0 %v1107
      %v1467 = vpop.f32.mrb[0].mxu0
      %v1468 = vadd.f32 0.0, %v1467
      %v1469 = vpop.f32.mrb[0].mxu0
      %v1470 = vadd.f32 0.0, %v1469
      %1471 = vmatprep.mubr.f32.mxu0 %v1110
      %1472 = vmatmul.mubr.f32.gmra.mrb[0].mxu0 %v1109
      %v1473 = vpop.f32.mrb[0].mxu0
      %v1474 = vadd.f32 0.0, %v1473
      %v1475 = vpop.f32.mrb[0].mxu0
      %v1476 = vadd.f32 0.0, %v1475
      %1477 = vmatprep.mubr.f32.mxu0 %v1112
      %1478 = vmatmul.mubr.f32.gmra.mrb[0].mxu0 %v1111
      %v1479 = vpop.f32.mrb[0].mxu0
      %v1480 = vadd.f32 0.0, %v1479
      %v1481 = vpop.f32.mrb[0].mxu0
      %v1482 = vadd.f32 0.0, %v1481
      %1483 = vmatprep.mubr.f32.mxu0 %v1114
      %1484 = vmatmul.mubr.f32.gmra.mrb[0].mxu0 %v1113
      %v1485 = vpop.f32.mrb[0].mxu0
      %v1486 = vadd.f32 0.0, %v1485
      %v1487 = vpop.f32.mrb[0].mxu0
      %v1488 = vadd.f32 0.0, %v1487
      %1489 = vmatprep.mubr.f32.mxu0 %v1116
      %1490 = vmatmul.mubr.f32.gmra.mrb[0].mxu0 %v1115
      %v1491 = vpop.f32.mrb[0].mxu0
      %v1492 = vadd.f32 0.0, %v1491
      %v1493 = vpop.f32.mrb[0].mxu0
      %v1494 = vadd.f32 0.0, %v1493
      %1495 = vmatprep.mubr.f32.mxu0 %v1118
      %1496 = vmatmul.mubr.f32.gmra.mrb[0].mxu0 %v1117
      %v1497 = vpop.f32.mrb[0].mxu0
      %v1498 = vadd.f32 0.0, %v1497
      %v1499 = vpop.f32.mrb[0].mxu0
      %v1500 = vadd.f32 0.0, %v1499
      %1501 = vmatprep.mubr.f32.mxu0 %v1120
      %1502 = vmatmul.mubr.f32.gmra.mrb[0].mxu0 %v1119
      %v1503 = vpop.f32.mrb[0].mxu0
      %v1504 = vadd.f32 0.0, %v1503
      %v1505 = vpop.f32.mrb[0].mxu0
      %v1506 = vadd.f32 0.0, %v1505
      %1507 = vmatprep.mubr.f32.mxu0 %v1122
      %1508 = vmatmul.mubr.f32.gmra.mrb[0].mxu0 %v1121
      %v1509 = vpop.f32.mrb[0].mxu0
      %v1510 = vadd.f32 0.0, %v1509
      %v1511 = vpop.f32.mrb[0].mxu0
      %v1512 = vadd.f32 0.0, %v1511
      %1513 = vmatprep.mubr.f32.mxu0 %v1124
      %1514 = vmatmul.mubr.f32.gmra.mrb[0].mxu0 %v1123
      %v1515 = vpop.f32.mrb[0].mxu0
      %v1516 = vadd.f32 0.0, %v1515
      %v1517 = vpop.f32.mrb[0].mxu0
      %v1518 = vadd.f32 0.0, %v1517
      %1519 = vmatprep.mubr.f32.mxu0 %v1126
      %1520 = vmatmul.mubr.f32.gmra.mrb[0].mxu0 %v1125
      %v1521 = vpop.f32.mrb[0].mxu0
      %v1522 = vadd.f32 0.0, %v1521
      %v1523 = vpop.f32.mrb[0].mxu0
      %v1524 = vadd.f32 0.0, %v1523
      %1525 = vmatprep.mubr.f32.mxu0 %v1128
      %1526 = vmatmul.mubr.f32.gmra.mrb[0].mxu0 %v1127
      %v1527 = vpop.f32.mrb[0].mxu0
      %v1528 = vadd.f32 0.0, %v1527
      %v1529 = vpop.f32.mrb[0].mxu0
      %v1530 = vadd.f32 0.0, %v1529
      %1531 = vmatprep.mubr.f32.mxu0 %v1130
      %1532 = vmatmul.mubr.f32.gmra.mrb[0].mxu0 %v1129
      %v1533 = vpop.f32.mrb[0].mxu0
      %v1534 = vadd.f32 0.0, %v1533
      %v1535 = vpop.f32.mrb[0].mxu0
      %v1536 = vadd.f32 0.0, %v1535
      %1537 = vmatprep.mubr.f32.mxu0 %v1132
      %1538 = vmatmul.mubr.f32.gmra.mrb[0].mxu0 %v1131
      %v1539 = vpop.f32.mrb[0].mxu0
      %v1540 = vadd.f32 0.0, %v1539
      %v1541 = vpop.f32.mrb[0].mxu0
      %v1542 = vadd.f32 0.0, %v1541
      %1543 = vmatprep.mubr.f32.mxu0 %v1134
      %1544 = vmatmul.mubr.f32.gmra.mrb[0].mxu0 %v1133
      %v1545 = vpop.f32.mrb[0].mxu0
      %v1546 = vadd.f32 0.0, %v1545
      %v1547 = vpop.f32.mrb[0].mxu0
      %v1548 = vadd.f32 0.0, %v1547
      %1549 = vmatprep.mubr.f32.mxu0 %v1136
      %1550 = vmatmul.mubr.f32.gmra.mrb[0].mxu0 %v1135
      %v1551 = vpop.f32.mrb[0].mxu0
      %v1552 = vadd.f32 0.0, %v1551
      %v1553 = vpop.f32.mrb[0].mxu0
      %v1554 = vadd.f32 0.0, %v1553
      %1555 = vmatprep.mubr.f32.mxu0 %v1138
      %1556 = vmatmul.mubr.f32.gmra.mrb[0].mxu0 %v1137
      %v1557 = vpop.f32.mrb[0].mxu0
      %v1558 = vadd.f32 0.0, %v1557
      %v1559 = vpop.f32.mrb[0].mxu0
      %v1560 = vadd.f32 0.0, %v1559
      %1561 = vmatprep.mubr.f32.mxu0 %v1140
      %1562 = vmatmul.mubr.f32.gmra.mrb[0].mxu0 %v1139
      %v1563 = vpop.f32.mrb[0].mxu0
      %v1564 = vadd.f32 0.0, %v1563
      %v1565 = vpop.f32.mrb[0].mxu0
      %v1566 = vadd.f32 0.0, %v1565
      %1567 = vdwg.mxu0
      %1568 = vmatprep.subr.mxu0 0.0
      %1569 = vmatpush1.msra.mxu0 %v1175
      %1570 = vmatprep.subr.mxu0 0.0
      %1571 = vmatpush1.msra.mxu0 %v1178
      %1572 = vmatprep.subr.mxu0 0.0
      %1573 = vmatpush1.msra.mxu0 %v1181
      %1574 = vmatprep.subr.mxu0 0.0
      %1575 = vmatpush1.msra.mxu0 %v1184
      %1576 = vmatprep.subr.mxu0 0.0
      %1577 = vmatpush1.msra.mxu0 %v1187
      %1578 = vmatprep.subr.mxu0 0.0
      %1579 = vmatpush1.msra.mxu0 %v1190
      %1580 = vmatprep.subr.mxu0 0.0
      %1581 = vmatpush1.msra.mxu0 %v1193
      %1582 = vmatprep.subr.mxu0 0.0
      %1583 = vmatpush1.msra.mxu0 %v1196
      %1584 = vmatprep.subr.mxu0 0.0
      %1585 = vmatpush1.msra.mxu0 %v1199
      %1586 = vmatprep.subr.mxu0 0.0
      %1587 = vmatpush1.msra.mxu0 %v1202
      %1588 = vmatprep.subr.mxu0 0.0
      %1589 = vmatpush1.msra.mxu0 %v1205
      %1590 = vmatprep.subr.mxu0 0.0
      %1591 = vmatpush1.msra.mxu0 %v1208
      %1592 = vmatprep.subr.mxu0 0.0
      %1593 = vmatpush1.msra.mxu0 %v1211
      %1594 = vmatprep.subr.mxu0 0.0
      %1595 = vmatpush1.msra.mxu0 %v1214
      %1596 = vmatprep.subr.mxu0 0.0
      %1597 = vmatpush1.msra.mxu0 %v1217
      %1598 = vmatprep.subr.mxu0 0.0
      %1599 = vmatpush1.msra.mxu0 %v1220
      %1600 = vmatprep.subr.mxu0 0.0
      %1601 = vmatpush1.msra.mxu0 %v1223
      %1602 = vmatprep.subr.mxu0 0.0
      %1603 = vmatpush1.msra.mxu0 %v1226
      %1604 = vmatprep.subr.mxu0 0.0
      %1605 = vmatpush1.msra.mxu0 %v1229
      %1606 = vmatprep.subr.mxu0 0.0
      %1607 = vmatpush1.msra.mxu0 %v1232
      %1608 = vmatprep.subr.mxu0 0.0
      %1609 = vmatpush1.msra.mxu0 %v1235
      %1610 = vmatprep.subr.mxu0 0.0
      %1611 = vmatpush1.msra.mxu0 %v1238
      %1612 = vmatprep.subr.mxu0 0.0
      %1613 = vmatpush1.msra.mxu0 %v1241
      %1614 = vmatprep.subr.mxu0 0.0
      %1615 = vmatpush1.msra.mxu0 %v1244
      %1616 = vmatprep.subr.mxu0 0.0
      %1617 = vmatpush1.msra.mxu0 %v1247
      %1618 = vmatprep.subr.mxu0 0.0
      %1619 = vmatpush1.msra.mxu0 %v1250
      %1620 = vmatprep.subr.mxu0 0.0
      %1621 = vmatpush1.msra.mxu0 %v1253
      %1622 = vmatprep.subr.mxu0 0.0
      %1623 = vmatpush1.msra.mxu0 %v1256
      %1624 = vmatprep.subr.mxu0 0.0
      %1625 = vmatpush1.msra.mxu0 %v1259
      %1626 = vmatprep.subr.mxu0 0.0
      %1627 = vmatpush1.msra.mxu0 %v1262
      %1628 = vmatprep.subr.mxu0 0.0
      %1629 = vmatpush1.msra.mxu0 %v1265
      %1630 = vmatprep.subr.mxu0 0.0
      %1631 = vmatpush1.msra.mxu0 %v1268
      %1632 = vmatprep.mubr.f32.mxu0 %v1090
      %1633 = vmatmul.mubr.f32.gmra.mrb[0].mxu0 %v1089
      %v1634 = vpop.f32.mrb[0].mxu0
      %v1635 = vadd.f32 0.0, %v1634
      %v1636 = vpop.f32.mrb[0].mxu0
      %1637 = vmatprep.mubr.f32.mxu0 %v1092
      %1638 = vmatmul.mubr.f32.gmra.mrb[0].mxu0 %v1091
      %v1639 = vpop.f32.mrb[0].mxu0
      %v1640 = vadd.f32 0.0, %v1639
      %v1641 = vpop.f32.mrb[0].mxu0
      %1642 = vmatprep.mubr.f32.mxu0 %v1094
      %1643 = vmatmul.mubr.f32.gmra.mrb[0].mxu0 %v1093
      %v1644 = vpop.f32.mrb[0].mxu0
      %v1645 = vadd.f32 0.0, %v1644
      %v1646 = vpop.f32.mrb[0].mxu0
      %1647 = vmatprep.mubr.f32.mxu0 %v1096
      %1648 = vmatmul.mubr.f32.gmra.mrb[0].mxu0 %v1095
      %v1649 = vpop.f32.mrb[0].mxu0
      %v1650 = vadd.f32 0.0, %v1649
      %v1651 = vpop.f32.mrb[0].mxu0
      %1652 = vmatprep.mubr.f32.mxu0 %v1098
      %1653 = vmatmul.mubr.f32.gmra.mrb[0].mxu0 %v1097
      %v1654 = vpop.f32.mrb[0].mxu0
      %v1655 = vadd.f32 0.0, %v1654
      %v1656 = vpop.f32.mrb[0].mxu0
      %1657 = vmatprep.mubr.f32.mxu0 %v1100
      %1658 = vmatmul.mubr.f32.gmra.mrb[0].mxu0 %v1099
      %v1659 = vpop.f32.mrb[0].mxu0
      %v1660 = vadd.f32 0.0, %v1659
      %v1661 = vpop.f32.mrb[0].mxu0
      %1662 = vmatprep.mubr.f32.mxu0 %v1102
      %1663 = vmatmul.mubr.f32.gmra.mrb[0].mxu0 %v1101
      %v1664 = vpop.f32.mrb[0].mxu0
      %v1665 = vadd.f32 0.0, %v1664
      %v1666 = vpop.f32.mrb[0].mxu0
      %1667 = vmatprep.mubr.f32.mxu0 %v1104
      %1668 = vmatmul.mubr.f32.gmra.mrb[0].mxu0 %v1103
      %v1669 = vpop.f32.mrb[0].mxu0
      %v1670 = vadd.f32 0.0, %v1669
      %v1671 = vpop.f32.mrb[0].mxu0
      %1672 = vmatprep.mubr.f32.mxu0 %v1106
      %1673 = vmatmul.mubr.f32.gmra.mrb[0].mxu0 %v1105
      %v1674 = vpop.f32.mrb[0].mxu0
      %v1675 = vadd.f32 0.0, %v1674
      %v1676 = vpop.f32.mrb[0].mxu0
      %1677 = vmatprep.mubr.f32.mxu0 %v1108
      %1678 = vmatmul.mubr.f32.gmra.mrb[0].mxu0 %v1107
      %v1679 = vpop.f32.mrb[0].mxu0
      %v1680 = vadd.f32 0.0, %v1679
      %v1681 = vpop.f32.mrb[0].mxu0
      %1682 = vmatprep.mubr.f32.mxu0 %v1110
      %1683 = vmatmul.mubr.f32.gmra.mrb[0].mxu0 %v1109
      %v1684 = vpop.f32.mrb[0].mxu0
      %v1685 = vadd.f32 0.0, %v1684
      %v1686 = vpop.f32.mrb[0].mxu0
      %1687 = vmatprep.mubr.f32.mxu0 %v1112
      %1688 = vmatmul.mubr.f32.gmra.mrb[0].mxu0 %v1111
      %v1689 = vpop.f32.mrb[0].mxu0
      %v1690 = vadd.f32 0.0, %v1689
      %v1691 = vpop.f32.mrb[0].mxu0
      %1692 = vmatprep.mubr.f32.mxu0 %v1114
      %1693 = vmatmul.mubr.f32.gmra.mrb[0].mxu0 %v1113
      %v1694 = vpop.f32.mrb[0].mxu0
      %v1695 = vadd.f32 0.0, %v1694
      %v1696 = vpop.f32.mrb[0].mxu0
      %1697 = vmatprep.mubr.f32.mxu0 %v1116
      %1698 = vmatmul.mubr.f32.gmra.mrb[0].mxu0 %v1115
      %v1699 = vpop.f32.mrb[0].mxu0
      %v1700 = vadd.f32 0.0, %v1699
      %v1701 = vpop.f32.mrb[0].mxu0
      %1702 = vmatprep.mubr.f32.mxu0 %v1118
      %1703 = vmatmul.mubr.f32.gmra.mrb[0].mxu0 %v1117
      %v1704 = vpop.f32.mrb[0].mxu0
      %v1705 = vadd.f32 0.0, %v1704
      %v1706 = vpop.f32.mrb[0].mxu0
      %1707 = vmatprep.mubr.f32.mxu0 %v1120
      %1708 = vmatmul.mubr.f32.gmra.mrb[0].mxu0 %v1119
      %v1709 = vpop.f32.mrb[0].mxu0
      %v1710 = vadd.f32 0.0, %v1709
      %v1711 = vpop.f32.mrb[0].mxu0
      %1712 = vmatprep.mubr.f32.mxu0 %v1122
      %1713 = vmatmul.mubr.f32.gmra.mrb[0].mxu0 %v1121
      %v1714 = vpop.f32.mrb[0].mxu0
      %v1715 = vadd.f32 0.0, %v1714
      %v1716 = vpop.f32.mrb[0].mxu0
      %1717 = vmatprep.mubr.f32.mxu0 %v1124
      %1718 = vmatmul.mubr.f32.gmra.mrb[0].mxu0 %v1123
      %v1719 = vpop.f32.mrb[0].mxu0
      %v1720 = vadd.f32 0.0, %v1719
      %v1721 = vpop.f32.mrb[0].mxu0
      %1722 = vmatprep.mubr.f32.mxu0 %v1126
      %1723 = vmatmul.mubr.f32.gmra.mrb[0].mxu0 %v1125
      %v1724 = vpop.f32.mrb[0].mxu0
      %v1725 = vadd.f32 0.0, %v1724
      %v1726 = vpop.f32.mrb[0].mxu0
      %1727 = vmatprep.mubr.f32.mxu0 %v1128
      %1728 = vmatmul.mubr.f32.gmra.mrb[0].mxu0 %v1127
      %v1729 = vpop.f32.mrb[0].mxu0
      %v1730 = vadd.f32 0.0, %v1729
      %v1731 = vpop.f32.mrb[0].mxu0
      %1732 = vmatprep.mubr.f32.mxu0 %v1130
      %1733 = vmatmul.mubr.f32.gmra.mrb[0].mxu0 %v1129
      %v1734 = vpop.f32.mrb[0].mxu0
      %v1735 = vadd.f32 0.0, %v1734
      %v1736 = vpop.f32.mrb[0].mxu0
      %1737 = vmatprep.mubr.f32.mxu0 %v1132
      %1738 = vmatmul.mubr.f32.gmra.mrb[0].mxu0 %v1131
      %v1739 = vpop.f32.mrb[0].mxu0
      %v1740 = vadd.f32 0.0, %v1739
      %v1741 = vpop.f32.mrb[0].mxu0
      %1742 = vmatprep.mubr.f32.mxu0 %v1134
      %1743 = vmatmul.mubr.f32.gmra.mrb[0].mxu0 %v1133
      %v1744 = vpop.f32.mrb[0].mxu0
      %v1745 = vadd.f32 0.0, %v1744
      %v1746 = vpop.f32.mrb[0].mxu0
      %1747 = vmatprep.mubr.f32.mxu0 %v1136
      %1748 = vmatmul.mubr.f32.gmra.mrb[0].mxu0 %v1135
      %v1749 = vpop.f32.mrb[0].mxu0
      %v1750 = vadd.f32 0.0, %v1749
      %v1751 = vpop.f32.mrb[0].mxu0
      %1752 = vmatprep.mubr.f32.mxu0 %v1138
      %1753 = vmatmul.mubr.f32.gmra.mrb[0].mxu0 %v1137
      %v1754 = vpop.f32.mrb[0].mxu0
      %v1755 = vadd.f32 0.0, %v1754
      %v1756 = vpop.f32.mrb[0].mxu0
      %1757 = vmatprep.mubr.f32.mxu0 %v1140
      %1758 = vmatmul.mubr.f32.gmra.mrb[0].mxu0 %v1139
      %v1759 = vpop.f32.mrb[0].mxu0
      %v1760 = vadd.f32 0.0, %v1759
      %v1761 = vpop.f32.mrb[0].mxu0
      %1762 = vdwg.mxu0
      %v1763 = vadd.f32 %v1269, %v1414
      %v1764 = vadd.f32 %v1270, %v1416
      %v1765 = vadd.f32 %v1271, %v1635
      %v1766 = vadd.f32 %v1272, %v1420
      %v1767 = vadd.f32 %v1273, %v1422
      %v1768 = vadd.f32 %v1274, %v1640
      %v1769 = vadd.f32 %v1275, %v1426
      %v1770 = vadd.f32 %v1276, %v1428
      %v1771 = vadd.f32 %v1277, %v1645
      %v1772 = vadd.f32 %v1278, %v1432
      %v1773 = vadd.f32 %v1279, %v1434
      %v1774 = vadd.f32 %v1280, %v1650
      %v1775 = vadd.f32 %v1281, %v1438
      %v1776 = vadd.f32 %v1282, %v1440
      %v1777 = vadd.f32 %v1283, %v1655
      %v1778 = vadd.f32 %v1284, %v1444
      %v1779 = vadd.f32 %v1285, %v1446
      %v1780 = vadd.f32 %v1286, %v1660
      %v1781 = vadd.f32 %v1287, %v1450
      %v1782 = vadd.f32 %v1288, %v1452
      %v1783 = vadd.f32 %v1289, %v1665
      %v1784 = vadd.f32 %v1290, %v1456
      %v1785 = vadd.f32 %v1291, %v1458
      %v1786 = vadd.f32 %v1292, %v1670
      %v1787 = vadd.f32 %v1293, %v1462
      %v1788 = vadd.f32 %v1294, %v1464
      %v1789 = vadd.f32 %v1295, %v1675
      %v1790 = vadd.f32 %v1296, %v1468
      %v1791 = vadd.f32 %v1297, %v1470
      %v1792 = vadd.f32 %v1298, %v1680
      %v1793 = vadd.f32 %v1299, %v1474
      %v1794 = vadd.f32 %v1300, %v1476
      %v1795 = vadd.f32 %v1301, %v1685
      %v1796 = vadd.f32 %v1302, %v1480
      %v1797 = vadd.f32 %v1303, %v1482
      %v1798 = vadd.f32 %v1304, %v1690
      %v1799 = vadd.f32 %v1305, %v1486
      %v1800 = vadd.f32 %v1306, %v1488
      %v1801 = vadd.f32 %v1307, %v1695
      %v1802 = vadd.f32 %v1308, %v1492
      %v1803 = vadd.f32 %v1309, %v1494
      %v1804 = vadd.f32 %v1310, %v1700
      %v1805 = vadd.f32 %v1311, %v1498
      %v1806 = vadd.f32 %v1312, %v1500
      %v1807 = vadd.f32 %v1313, %v1705
      %v1808 = vadd.f32 %v1314, %v1504
      %v1809 = vadd.f32 %v1315, %v1506
      %v1810 = vadd.f32 %v1316, %v1710
      %v1811 = vadd.f32 %v1317, %v1510
      %v1812 = vadd.f32 %v1318, %v1512
      %v1813 = vadd.f32 %v1319, %v1715
      %v1814 = vadd.f32 %v1320, %v1516
      %v1815 = vadd.f32 %v1321, %v1518
      %v1816 = vadd.f32 %v1322, %v1720
      %v1817 = vadd.f32 %v1323, %v1522
      %v1818 = vadd.f32 %v1324, %v1524
      %v1819 = vadd.f32 %v1325, %v1725
      %v1820 = vadd.f32 %v1326, %v1528
      %v1821 = vadd.f32 %v1327, %v1530
      %v1822 = vadd.f32 %v1328, %v1730
      %v1823 = vadd.f32 %v1329, %v1534
      %v1824 = vadd.f32 %v1330, %v1536
      %v1825 = vadd.f32 %v1331, %v1735
      %v1826 = vadd.f32 %v1332, %v1540
      %v1827 = vadd.f32 %v1333, %v1542
      %v1828 = vadd.f32 %v1334, %v1740
      %v1829 = vadd.f32 %v1335, %v1546
      %v1830 = vadd.f32 %v1336, %v1548
      %v1831 = vadd.f32 %v1337, %v1745
      %v1832 = vadd.f32 %v1338, %v1552
      %v1833 = vadd.f32 %v1339, %v1554
      %v1834 = vadd.f32 %v1340, %v1750
      %v1835 = vadd.f32 %v1341, %v1558
      %v1836 = vadd.f32 %v1342, %v1560
      %v1837 = vadd.f32 %v1343, %v1755
      %v1838 = vadd.f32 %v1344, %v1564
      %v1839 = vadd.f32 %v1345, %v1566
      %v1840 = vadd.f32 %v1346, %v1760
      %1841 = vst [vmem:[#allocation2] sm:$0xff] %v1763
      %1842 = vst [vmem:[#allocation2 + $0x8] sm:$0xff] %v1764
      %1843 = vst [vmem:[#allocation2 + $0x10] sm:$0xff] %v1765
      %1844 = vst [vmem:[#allocation2 + $0x18] sm:$0xff] %v1766
      %1845 = vst [vmem:[#allocation2 + $0x20] sm:$0xff] %v1767
      %1846 = vst [vmem:[#allocation2 + $0x28] sm:$0xff] %v1768
      %1847 = vst [vmem:[#allocation2 + $0x30] sm:$0xff] %v1769
      %1848 = vst [vmem:[#allocation2 + $0x38] sm:$0xff] %v1770
      %1849 = vst [vmem:[#allocation2 + $0x40] sm:$0xff] %v1771
      %1850 = vst [vmem:[#allocation2 + $0x48] sm:$0xff] %v1772
      %1851 = vst [vmem:[#allocation2 + $0x50] sm:$0xff] %v1773
      %1852 = vst [vmem:[#allocation2 + $0x58] sm:$0xff] %v1774
      %1853 = vst [vmem:[#allocation2 + $0x60] sm:$0xff] %v1775
      %1854 = vst [vmem:[#allocation2 + $0x68] sm:$0xff] %v1776
      %1855 = vst [vmem:[#allocation2 + $0x70] sm:$0xff] %v1777
      %1856 = vst [vmem:[#allocation2 + $0x78] sm:$0xff] %v1778
      %1857 = vst [vmem:[#allocation2 + $0x80] sm:$0xff] %v1779
      %1858 = vst [vmem:[#allocation2 + $0x88] sm:$0xff] %v1780
      %1859 = vst [vmem:[#allocation2 + $0x90] sm:$0xff] %v1781
      %1860 = vst [vmem:[#allocation2 + $0x98] sm:$0xff] %v1782
      %1861 = vst [vmem:[#allocation2 + $0xa0] sm:$0xff] %v1783
      %1862 = vst [vmem:[#allocation2 + $0xa8] sm:$0xff] %v1784
      %1863 = vst [vmem:[#allocation2 + $0xb0] sm:$0xff] %v1785
      %1864 = vst [vmem:[#allocation2 + $0xb8] sm:$0xff] %v1786
      %1865 = vst [vmem:[#allocation2 + $0xc0] sm:$0xff] %v1787
      %1866 = vst [vmem:[#allocation2 + $0xc8] sm:$0xff] %v1788
      %1867 = vst [vmem:[#allocation2 + $0xd0] sm:$0xff] %v1789
      %1868 = vst [vmem:[#allocation2 + $0xd8] sm:$0xff] %v1790
      %1869 = vst [vmem:[#allocation2 + $0xe0] sm:$0xff] %v1791
      %1870 = vst [vmem:[#allocation2 + $0xe8] sm:$0xff] %v1792
      %1871 = vst [vmem:[#allocation2 + $0xf0] sm:$0xff] %v1793
      %1872 = vst [vmem:[#allocation2 + $0xf8] sm:$0xff] %v1794
      %1873 = vst [vmem:[#allocation2 + $0x100] sm:$0xff] %v1795
      %1874 = vst [vmem:[#allocation2 + $0x108] sm:$0xff] %v1796
      %1875 = vst [vmem:[#allocation2 + $0x110] sm:$0xff] %v1797
      %1876 = vst [vmem:[#allocation2 + $0x118] sm:$0xff] %v1798
      %1877 = vst [vmem:[#allocation2 + $0x120] sm:$0xff] %v1799
      %1878 = vst [vmem:[#allocation2 + $0x128] sm:$0xff] %v1800
      %1879 = vst [vmem:[#allocation2 + $0x130] sm:$0xff] %v1801
      %1880 = vst [vmem:[#allocation2 + $0x138] sm:$0xff] %v1802
      %1881 = vst [vmem:[#allocation2 + $0x140] sm:$0xff] %v1803
      %1882 = vst [vmem:[#allocation2 + $0x148] sm:$0xff] %v1804
      %1883 = vst [vmem:[#allocation2 + $0x150] sm:$0xff] %v1805
      %1884 = vst [vmem:[#allocation2 + $0x158] sm:$0xff] %v1806
      %1885 = vst [vmem:[#allocation2 + $0x160] sm:$0xff] %v1807
      %1886 = vst [vmem:[#allocation2 + $0x168] sm:$0xff] %v1808
      %1887 = vst [vmem:[#allocation2 + $0x170] sm:$0xff] %v1809
      %1888 = vst [vmem:[#allocation2 + $0x178] sm:$0xff] %v1810
      %1889 = vst [vmem:[#allocation2 + $0x180] sm:$0xff] %v1811
      %1890 = vst [vmem:[#allocation2 + $0x188] sm:$0xff] %v1812
      %1891 = vst [vmem:[#allocation2 + $0x190] sm:$0xff] %v1813
      %1892 = vst [vmem:[#allocation2 + $0x198] sm:$0xff] %v1814
      %1893 = vst [vmem:[#allocation2 + $0x1a0] sm:$0xff] %v1815
      %1894 = vst [vmem:[#allocation2 + $0x1a8] sm:$0xff] %v1816
      %1895 = vst [vmem:[#allocation2 + $0x1b0] sm:$0xff] %v1817
      %1896 = vst [vmem:[#allocation2 + $0x1b8] sm:$0xff] %v1818
      %1897 = vst [vmem:[#allocation2 + $0x1c0] sm:$0xff] %v1819
      %1898 = vst [vmem:[#allocation2 + $0x1c8] sm:$0xff] %v1820
      %1899 = vst [vmem:[#allocation2 + $0x1d0] sm:$0xff] %v1821
      %1900 = vst [vmem:[#allocation2 + $0x1d8] sm:$0xff] %v1822
      %1901 = vst [vmem:[#allocation2 + $0x1e0] sm:$0xff] %v1823
      %1902 = vst [vmem:[#allocation2 + $0x1e8] sm:$0xff] %v1824
      %1903 = vst [vmem:[#allocation2 + $0x1f0] sm:$0xff] %v1825
      %1904 = vst [vmem:[#allocation2 + $0x1f8] sm:$0xff] %v1826
      %1905 = vst [vmem:[#allocation2 + $0x200] sm:$0xff] %v1827
      %1906 = vst [vmem:[#allocation2 + $0x208] sm:$0xff] %v1828
      %1907 = vst [vmem:[#allocation2 + $0x210] sm:$0xff] %v1829
      %1908 = vst [vmem:[#allocation2 + $0x218] sm:$0xff] %v1830
      %1909 = vst [vmem:[#allocation2 + $0x220] sm:$0xff] %v1831
      %1910 = vst [vmem:[#allocation2 + $0x228] sm:$0xff] %v1832
      %1911 = vst [vmem:[#allocation2 + $0x230] sm:$0xff] %v1833
      %1912 = vst [vmem:[#allocation2 + $0x238] sm:$0xff] %v1834
      %1913 = vst [vmem:[#allocation2 + $0x240] sm:$0xff] %v1835
      %1914 = vst [vmem:[#allocation2 + $0x248] sm:$0xff] %v1836
      %1915 = vst [vmem:[#allocation2 + $0x250] sm:$0xff] %v1837
      %1916 = vst [vmem:[#allocation2 + $0x258] sm:$0xff] %v1838
      %1917 = vst [vmem:[#allocation2 + $0x260] sm:$0xff] %v1839
      %1918 = vst [vmem:[#allocation2 + $0x268] sm:$0xff] %v1840
      %v1919 = vld [vmem:[#allocation2] sm:$0xff]
      %v1920 = vld [vmem:[#allocation2 + $0x8] sm:$0xff]
      %v1921 = vld [vmem:[#allocation2 + $0x10] sm:$0xff]
      %v1922 = vld [vmem:[#allocation2 + $0x18] sm:$0xff]
      %v1923 = vld [vmem:[#allocation2 + $0x20] sm:$0xff]
      %v1924 = vld [vmem:[#allocation2 + $0x28] sm:$0xff]
      %v1925 = vld [vmem:[#allocation2 + $0x30] sm:$0xff]
      %v1926 = vld [vmem:[#allocation2 + $0x38] sm:$0xff]
      %v1927 = vld [vmem:[#allocation2 + $0x40] sm:$0xff]
      %v1928 = vld [vmem:[#allocation2 + $0x48] sm:$0xff]
      %v1929 = vld [vmem:[#allocation2 + $0x50] sm:$0xff]
      %v1930 = vld [vmem:[#allocation2 + $0x58] sm:$0xff]
      %v1931 = vld [vmem:[#allocation2 + $0x60] sm:$0xff]
      %v1932 = vld [vmem:[#allocation2 + $0x68] sm:$0xff]
      %v1933 = vld [vmem:[#allocation2 + $0x70] sm:$0xff]
      %v1934 = vld [vmem:[#allocation2 + $0x78] sm:$0xff]
      %v1935 = vld [vmem:[#allocation2 + $0x80] sm:$0xff]
      %v1936 = vld [vmem:[#allocation2 + $0x88] sm:$0xff]
      %v1937 = vld [vmem:[#allocation2 + $0x90] sm:$0xff]
      %v1938 = vld [vmem:[#allocation2 + $0x98] sm:$0xff]
      %v1939 = vld [vmem:[#allocation2 + $0xa0] sm:$0xff]
      %v1940 = vld [vmem:[#allocation2 + $0xa8] sm:$0xff]
      %v1941 = vld [vmem:[#allocation2 + $0xb0] sm:$0xff]
      %v1942 = vld [vmem:[#allocation2 + $0xb8] sm:$0xff]
      %v1943 = vld [vmem:[#allocation2 + $0xc0] sm:$0xff]
      %v1944 = vld [vmem:[#allocation2 + $0xc8] sm:$0xff]
      %v1945 = vld [vmem:[#allocation2 + $0xd0] sm:$0xff]
      %v1946 = vld [vmem:[#allocation2 + $0xd8] sm:$0xff]
      %v1947 = vld [vmem:[#allocation2 + $0xe0] sm:$0xff]
      %v1948 = vld [vmem:[#allocation2 + $0xe8] sm:$0xff]
      %v1949 = vld [vmem:[#allocation2 + $0xf0] sm:$0xff]
      %v1950 = vld [vmem:[#allocation2 + $0xf8] sm:$0xff]
      %v1951 = vld [vmem:[#allocation2 + $0x100] sm:$0xff]
      %v1952 = vld [vmem:[#allocation2 + $0x108] sm:$0xff]
      %v1953 = vld [vmem:[#allocation2 + $0x110] sm:$0xff]
      %v1954 = vld [vmem:[#allocation2 + $0x118] sm:$0xff]
      %v1955 = vld [vmem:[#allocation2 + $0x120] sm:$0xff]
      %v1956 = vld [vmem:[#allocation2 + $0x128] sm:$0xff]
      %v1957 = vld [vmem:[#allocation2 + $0x130] sm:$0xff]
      %v1958 = vld [vmem:[#allocation2 + $0x138] sm:$0xff]
      %v1959 = vld [vmem:[#allocation2 + $0x140] sm:$0xff]
      %v1960 = vld [vmem:[#allocation2 + $0x148] sm:$0xff]
      %v1961 = vld [vmem:[#allocation2 + $0x150] sm:$0xff]
      %v1962 = vld [vmem:[#allocation2 + $0x158] sm:$0xff]
      %v1963 = vld [vmem:[#allocation2 + $0x160] sm:$0xff]
      %v1964 = vld [vmem:[#allocation2 + $0x168] sm:$0xff]
      %v1965 = vld [vmem:[#allocation2 + $0x170] sm:$0xff]
      %v1966 = vld [vmem:[#allocation2 + $0x178] sm:$0xff]
      %v1967 = vld [vmem:[#allocation2 + $0x180] sm:$0xff]
      %v1968 = vld [vmem:[#allocation2 + $0x188] sm:$0xff]
      %v1969 = vld [vmem:[#allocation2 + $0x190] sm:$0xff]
      %v1970 = vld [vmem:[#allocation2 + $0x198] sm:$0xff]
      %v1971 = vld [vmem:[#allocation2 + $0x1a0] sm:$0xff]
      %v1972 = vld [vmem:[#allocation2 + $0x1a8] sm:$0xff]
      %v1973 = vld [vmem:[#allocation2 + $0x1b0] sm:$0xff]
      %v1974 = vld [vmem:[#allocation2 + $0x1b8] sm:$0xff]
      %v1975 = vld [vmem:[#allocation2 + $0x1c0] sm:$0xff]
      %v1976 = vld [vmem:[#allocation2 + $0x1c8] sm:$0xff]
      %v1977 = vld [vmem:[#allocation2 + $0x1d0] sm:$0xff]
      %v1978 = vld [vmem:[#allocation2 + $0x1d8] sm:$0xff]
      %v1979 = vld [vmem:[#allocation2 + $0x1e0] sm:$0xff]
      %v1980 = vld [vmem:[#allocation2 + $0x1e8] sm:$0xff]
      %v1981 = vld [vmem:[#allocation2 + $0x1f0] sm:$0xff]
      %v1982 = vld [vmem:[#allocation2 + $0x1f8] sm:$0xff]
      %v1983 = vld [vmem:[#allocation2 + $0x200] sm:$0xff]
      %v1984 = vld [vmem:[#allocation2 + $0x208] sm:$0xff]
      %v1985 = vld [vmem:[#allocation2 + $0x210] sm:$0xff]
      %v1986 = vld [vmem:[#allocation2 + $0x218] sm:$0xff]
      %v1987 = vld [vmem:[#allocation2 + $0x220] sm:$0xff]
      %v1988 = vld [vmem:[#allocation2 + $0x228] sm:$0xff]
      %v1989 = vld [vmem:[#allocation2 + $0x230] sm:$0xff]
      %v1990 = vld [vmem:[#allocation2 + $0x238] sm:$0xff]
      %v1991 = vld [vmem:[#allocation2 + $0x240] sm:$0xff]
      %v1992 = vld [vmem:[#allocation2 + $0x248] sm:$0xff]
      %v1993 = vld [vmem:[#allocation2 + $0x250] sm:$0xff]
      %v1994 = vld [vmem:[#allocation2 + $0x258] sm:$0xff]
      %v1995 = vld [vmem:[#allocation2 + $0x260] sm:$0xff]
      %v1996 = vld [vmem:[#allocation2 + $0x268] sm:$0xff]
      %s1997 = sld [smem:[#allocation4]]
      %v1998 = vstv %s1997
      %v1999 = vmul.f32 %v1919, %v1998
      %v2000 = vmul.f32 %v1920, %v1998
      %v2001 = vmul.f32 %v1921, %v1998
      %v2002 = vmul.f32 %v1922, %v1998
      %v2003 = vmul.f32 %v1923, %v1998
      %v2004 = vmul.f32 %v1924, %v1998
      %v2005 = vmul.f32 %v1925, %v1998
      %v2006 = vmul.f32 %v1926, %v1998
      %v2007 = vmul.f32 %v1927, %v1998
      %v2008 = vmul.f32 %v1928, %v1998
      %v2009 = vmul.f32 %v1929, %v1998
      %v2010 = vmul.f32 %v1930, %v1998
      %v2011 = vmul.f32 %v1931, %v1998
      %v2012 = vmul.f32 %v1932, %v1998
      %v2013 = vmul.f32 %v1933, %v1998
      %v2014 = vmul.f32 %v1934, %v1998
      %v2015 = vmul.f32 %v1935, %v1998
      %v2016 = vmul.f32 %v1936, %v1998
      %v2017 = vmul.f32 %v1937, %v1998
      %v2018 = vmul.f32 %v1938, %v1998
      %v2019 = vmul.f32 %v1939, %v1998
      %v2020 = vmul.f32 %v1940, %v1998
      %v2021 = vmul.f32 %v1941, %v1998
      %v2022 = vmul.f32 %v1942, %v1998
      %v2023 = vmul.f32 %v1943, %v1998
      %v2024 = vmul.f32 %v1944, %v1998
      %v2025 = vmul.f32 %v1945, %v1998
      %v2026 = vmul.f32 %v1946, %v1998
      %v2027 = vmul.f32 %v1947, %v1998
      %v2028 = vmul.f32 %v1948, %v1998
      %v2029 = vmul.f32 %v1949, %v1998
      %v2030 = vmul.f32 %v1950, %v1998
      %v2031 = vmul.f32 %v1951, %v1998
      %v2032 = vmul.f32 %v1952, %v1998
      %v2033 = vmul.f32 %v1953, %v1998
      %v2034 = vmul.f32 %v1954, %v1998
      %v2035 = vmul.f32 %v1955, %v1998
      %v2036 = vmul.f32 %v1956, %v1998
      %v2037 = vmul.f32 %v1957, %v1998
      %v2038 = vmul.f32 %v1958, %v1998
      %v2039 = vmul.f32 %v1959, %v1998
      %v2040 = vmul.f32 %v1960, %v1998
      %v2041 = vmul.f32 %v1961, %v1998
      %v2042 = vmul.f32 %v1962, %v1998
      %v2043 = vmul.f32 %v1963, %v1998
      %v2044 = vmul.f32 %v1964, %v1998
      %v2045 = vmul.f32 %v1965, %v1998
      %v2046 = vmul.f32 %v1966, %v1998
      %v2047 = vmul.f32 %v1967, %v1998
      %v2048 = vmul.f32 %v1968, %v1998
      %v2049 = vmul.f32 %v1969, %v1998
      %v2050 = vmul.f32 %v1970, %v1998
      %v2051 = vmul.f32 %v1971, %v1998
      %v2052 = vmul.f32 %v1972, %v1998
      %v2053 = vmul.f32 %v1973, %v1998
      %v2054 = vmul.f32 %v1974, %v1998
      %v2055 = vmul.f32 %v1975, %v1998
      %v2056 = vmul.f32 %v1976, %v1998
      %v2057 = vmul.f32 %v1977, %v1998
      %v2058 = vmul.f32 %v1978, %v1998
      %v2059 = vmul.f32 %v1979, %v1998
      %v2060 = vmul.f32 %v1980, %v1998
      %v2061 = vmul.f32 %v1981, %v1998
      %v2062 = vmul.f32 %v1982, %v1998
      %v2063 = vmul.f32 %v1983, %v1998
      %v2064 = vmul.f32 %v1984, %v1998
      %v2065 = vmul.f32 %v1985, %v1998
      %v2066 = vmul.f32 %v1986, %v1998
      %v2067 = vmul.f32 %v1987, %v1998
      %v2068 = vmul.f32 %v1988, %v1998
      %v2069 = vmul.f32 %v1989, %v1998
      %v2070 = vmul.f32 %v1990, %v1998
      %v2071 = vmul.f32 %v1991, %v1998
      %v2072 = vmul.f32 %v1992, %v1998
      %v2073 = vmul.f32 %v1993, %v1998
      %v2074 = vmul.f32 %v1994, %v1998
      %v2075 = vmul.f32 %v1995, %v1998
      %v2076 = vmul.f32 %v1996, %v1998
      %s2077 = sld [smem:[#allocation5]]
      %v2078 = vstv %s2077
      %v2079 = vadd.f32 %v1999, %v2078
      %v2080 = vadd.f32 %v2000, %v2078
      %v2081 = vadd.f32 %v2001, %v2078
      %v2082 = vadd.f32 %v2002, %v2078
      %v2083 = vadd.f32 %v2003, %v2078
      %v2084 = vadd.f32 %v2004, %v2078
      %v2085 = vadd.f32 %v2005, %v2078
      %v2086 = vadd.f32 %v2006, %v2078
      %v2087 = vadd.f32 %v2007, %v2078
      %v2088 = vadd.f32 %v2008, %v2078
      %v2089 = vadd.f32 %v2009, %v2078
      %v2090 = vadd.f32 %v2010, %v2078
      %v2091 = vadd.f32 %v2011, %v2078
      %v2092 = vadd.f32 %v2012, %v2078
      %v2093 = vadd.f32 %v2013, %v2078
      %v2094 = vadd.f32 %v2014, %v2078
      %v2095 = vadd.f32 %v2015, %v2078
      %v2096 = vadd.f32 %v2016, %v2078
      %v2097 = vadd.f32 %v2017, %v2078
      %v2098 = vadd.f32 %v2018, %v2078
      %v2099 = vadd.f32 %v2019, %v2078
      %v2100 = vadd.f32 %v2020, %v2078
      %v2101 = vadd.f32 %v2021, %v2078
      %v2102 = vadd.f32 %v2022, %v2078
      %v2103 = vadd.f32 %v2023, %v2078
      %v2104 = vadd.f32 %v2024, %v2078
      %v2105 = vadd.f32 %v2025, %v2078
      %v2106 = vadd.f32 %v2026, %v2078
      %v2107 = vadd.f32 %v2027, %v2078
      %v2108 = vadd.f32 %v2028, %v2078
      %v2109 = vadd.f32 %v2029, %v2078
      %v2110 = vadd.f32 %v2030, %v2078
      %v2111 = vadd.f32 %v2031, %v2078
      %v2112 = vadd.f32 %v2032, %v2078
      %v2113 = vadd.f32 %v2033, %v2078
      %v2114 = vadd.f32 %v2034, %v2078
      %v2115 = vadd.f32 %v2035, %v2078
      %v2116 = vadd.f32 %v2036, %v2078
      %v2117 = vadd.f32 %v2037, %v2078
      %v2118 = vadd.f32 %v2038, %v2078
      %v2119 = vadd.f32 %v2039, %v2078
      %v2120 = vadd.f32 %v2040, %v2078
      %v2121 = vadd.f32 %v2041, %v2078
      %v2122 = vadd.f32 %v2042, %v2078
      %v2123 = vadd.f32 %v2043, %v2078
      %v2124 = vadd.f32 %v2044, %v2078
      %v2125 = vadd.f32 %v2045, %v2078
      %v2126 = vadd.f32 %v2046, %v2078
      %v2127 = vadd.f32 %v2047, %v2078
      %v2128 = vadd.f32 %v2048, %v2078
      %v2129 = vadd.f32 %v2049, %v2078
      %v2130 = vadd.f32 %v2050, %v2078
      %v2131 = vadd.f32 %v2051, %v2078
      %v2132 = vadd.f32 %v2052, %v2078
      %v2133 = vadd.f32 %v2053, %v2078
      %v2134 = vadd.f32 %v2054, %v2078
      %v2135 = vadd.f32 %v2055, %v2078
      %v2136 = vadd.f32 %v2056, %v2078
      %v2137 = vadd.f32 %v2057, %v2078
      %v2138 = vadd.f32 %v2058, %v2078
      %v2139 = vadd.f32 %v2059, %v2078
      %v2140 = vadd.f32 %v2060, %v2078
      %v2141 = vadd.f32 %v2061, %v2078
      %v2142 = vadd.f32 %v2062, %v2078
      %v2143 = vadd.f32 %v2063, %v2078
      %v2144 = vadd.f32 %v2064, %v2078
      %v2145 = vadd.f32 %v2065, %v2078
      %v2146 = vadd.f32 %v2066, %v2078
      %v2147 = vadd.f32 %v2067, %v2078
      %v2148 = vadd.f32 %v2068, %v2078
      %v2149 = vadd.f32 %v2069, %v2078
      %v2150 = vadd.f32 %v2070, %v2078
      %v2151 = vadd.f32 %v2071, %v2078
      %v2152 = vadd.f32 %v2072, %v2078
      %v2153 = vadd.f32 %v2073, %v2078
      %v2154 = vadd.f32 %v2074, %v2078
      %v2155 = vadd.f32 %v2075, %v2078
      %v2156 = vadd.f32 %v2076, %v2078
      %2157 = vst [vmem:[#allocation6] sm:$0xff] %v2079
      %2158 = vst [vmem:[#allocation6 + $0x8] sm:$0xff] %v2080
      %2159 = vst [vmem:[#allocation6 + $0x10] sm:$0xff] %v2081
      %2160 = vst [vmem:[#allocation6 + $0x18] sm:$0xff] %v2082
      %2161 = vst [vmem:[#allocation6 + $0x20] sm:$0xff] %v2083
      %2162 = vst [vmem:[#allocation6 + $0x28] sm:$0xff] %v2084
      %2163 = vst [vmem:[#allocation6 + $0x30] sm:$0xff] %v2085
      %2164 = vst [vmem:[#allocation6 + $0x38] sm:$0xff] %v2086
      %2165 = vst [vmem:[#allocation6 + $0x40] sm:$0xff] %v2087
      %2166 = vst [vmem:[#allocation6 + $0x48] sm:$0xff] %v2088
      %2167 = vst [vmem:[#allocation6 + $0x50] sm:$0xff] %v2089
      %2168 = vst [vmem:[#allocation6 + $0x58] sm:$0xff] %v2090
      %2169 = vst [vmem:[#allocation6 + $0x60] sm:$0xff] %v2091
      %2170 = vst [vmem:[#allocation6 + $0x68] sm:$0xff] %v2092
      %2171 = vst [vmem:[#allocation6 + $0x70] sm:$0xff] %v2093
      %2172 = vst [vmem:[#allocation6 + $0x78] sm:$0xff] %v2094
      %2173 = vst [vmem:[#allocation6 + $0x80] sm:$0xff] %v2095
      %2174 = vst [vmem:[#allocation6 + $0x88] sm:$0xff] %v2096
      %2175 = vst [vmem:[#allocation6 + $0x90] sm:$0xff] %v2097
      %2176 = vst [vmem:[#allocation6 + $0x98] sm:$0xff] %v2098
      %2177 = vst [vmem:[#allocation6 + $0xa0] sm:$0xff] %v2099
      %2178 = vst [vmem:[#allocation6 + $0xa8] sm:$0xff] %v2100
      %2179 = vst [vmem:[#allocation6 + $0xb0] sm:$0xff] %v2101
      %2180 = vst [vmem:[#allocation6 + $0xb8] sm:$0xff] %v2102
      %2181 = vst [vmem:[#allocation6 + $0xc0] sm:$0xff] %v2103
      %2182 = vst [vmem:[#allocation6 + $0xc8] sm:$0xff] %v2104
      %2183 = vst [vmem:[#allocation6 + $0xd0] sm:$0xff] %v2105
      %2184 = vst [vmem:[#allocation6 + $0xd8] sm:$0xff] %v2106
      %2185 = vst [vmem:[#allocation6 + $0xe0] sm:$0xff] %v2107
      %2186 = vst [vmem:[#allocation6 + $0xe8] sm:$0xff] %v2108
      %2187 = vst [vmem:[#allocation6 + $0xf0] sm:$0xff] %v2109
      %2188 = vst [vmem:[#allocation6 + $0xf8] sm:$0xff] %v2110
      %2189 = vst [vmem:[#allocation6 + $0x100] sm:$0xff] %v2111
      %2190 = vst [vmem:[#allocation6 + $0x108] sm:$0xff] %v2112
      %2191 = vst [vmem:[#allocation6 + $0x110] sm:$0xff] %v2113
      %2192 = vst [vmem:[#allocation6 + $0x118] sm:$0xff] %v2114
      %2193 = vst [vmem:[#allocation6 + $0x120] sm:$0xff] %v2115
      %2194 = vst [vmem:[#allocation6 + $0x128] sm:$0xff] %v2116
      %2195 = vst [vmem:[#allocation6 + $0x130] sm:$0xff] %v2117
      %2196 = vst [vmem:[#allocation6 + $0x138] sm:$0xff] %v2118
      %2197 = vst [vmem:[#allocation6 + $0x140] sm:$0xff] %v2119
      %2198 = vst [vmem:[#allocation6 + $0x148] sm:$0xff] %v2120
      %2199 = vst [vmem:[#allocation6 + $0x150] sm:$0xff] %v2121
      %2200 = vst [vmem:[#allocation6 + $0x158] sm:$0xff] %v2122
      %2201 = vst [vmem:[#allocation6 + $0x160] sm:$0xff] %v2123
      %2202 = vst [vmem:[#allocation6 + $0x168] sm:$0xff] %v2124
      %2203 = vst [vmem:[#allocation6 + $0x170] sm:$0xff] %v2125
      %2204 = vst [vmem:[#allocation6 + $0x178] sm:$0xff] %v2126
      %2205 = vst [vmem:[#allocation6 + $0x180] sm:$0xff] %v2127
      %2206 = vst [vmem:[#allocation6 + $0x188] sm:$0xff] %v2128
      %2207 = vst [vmem:[#allocation6 + $0x190] sm:$0xff] %v2129
      %2208 = vst [vmem:[#allocation6 + $0x198] sm:$0xff] %v2130
      %2209 = vst [vmem:[#allocation6 + $0x1a0] sm:$0xff] %v2131
      %2210 = vst [vmem:[#allocation6 + $0x1a8] sm:$0xff] %v2132
      %2211 = vst [vmem:[#allocation6 + $0x1b0] sm:$0xff] %v2133
      %2212 = vst [vmem:[#allocation6 + $0x1b8] sm:$0xff] %v2134
      %2213 = vst [vmem:[#allocation6 + $0x1c0] sm:$0xff] %v2135
      %2214 = vst [vmem:[#allocation6 + $0x1c8] sm:$0xff] %v2136
      %2215 = vst [vmem:[#allocation6 + $0x1d0] sm:$0xff] %v2137
      %2216 = vst [vmem:[#allocation6 + $0x1d8] sm:$0xff] %v2138
      %2217 = vst [vmem:[#allocation6 + $0x1e0] sm:$0xff] %v2139
      %2218 = vst [vmem:[#allocation6 + $0x1e8] sm:$0xff] %v2140
      %2219 = vst [vmem:[#allocation6 + $0x1f0] sm:$0xff] %v2141
      %2220 = vst [vmem:[#allocation6 + $0x1f8] sm:$0xff] %v2142
      %2221 = vst [vmem:[#allocation6 + $0x200] sm:$0xff] %v2143
      %2222 = vst [vmem:[#allocation6 + $0x208] sm:$0xff] %v2144
      %2223 = vst [vmem:[#allocation6 + $0x210] sm:$0xff] %v2145
      %2224 = vst [vmem:[#allocation6 + $0x218] sm:$0xff] %v2146
      %2225 = vst [vmem:[#allocation6 + $0x220] sm:$0xff] %v2147
      %2226 = vst [vmem:[#allocation6 + $0x228] sm:$0xff] %v2148
      %2227 = vst [vmem:[#allocation6 + $0x230] sm:$0xff] %v2149
      %2228 = vst [vmem:[#allocation6 + $0x238] sm:$0xff] %v2150
      %2229 = vst [vmem:[#allocation6 + $0x240] sm:$0xff] %v2151
      %2230 = vst [vmem:[#allocation6 + $0x248] sm:$0xff] %v2152
      %2231 = vst [vmem:[#allocation6 + $0x250] sm:$0xff] %v2153
      %2232 = vst [vmem:[#allocation6 + $0x258] sm:$0xff] %v2154
      %2233 = vst [vmem:[#allocation6 + $0x260] sm:$0xff] %v2155
      %2234 = vst [vmem:[#allocation6 + $0x268] sm:$0xff] %v2156
    $region21: #{sanbet_layer.1} parent=1 // pred_fallthru
      _
    // Predicated region
    $region22: #{sanbet_layer.1} parent=1 // pred_check
      _
    $region23: #{sanbet_layer.1} parent=1 // pred_check_branch
      %2236 = sbr.rel (0) target = $region25
    $region24: #{sanbet_layer.1} parent=1 // pred_region
      %s2238 = ssub.s32 9984, 9600
      %2239 = vsyncadd [#allocation7], %s2238
      %s2240 = sshll.u32 [#allocation6], 4
      %s2241 = int_to_ptr.vmem [resolvable:$true] %s2240
      %2246 = dma.vmem_to_hbm [thread:$0]  %s2241, 9600, %s4, [#allocation7], 384, 384, 24
    $region25: #{sanbet_layer.1} parent=1 // pred_fallthru
      _
    // Predicated region
    $region26: #{sanbet_layer.1} parent=1 // pred_check
      _
    $region27: #{sanbet_layer.1} parent=1 // pred_check_branch
      %2248 = sbr.rel (0) target = $region29
    $region28: #{sanbet_layer.1} parent=1 // pred_region
      %2249 = dma.done [#allocation7], 9984
    $region29: #{sanbet_layer.1} parent=1 // pred_fallthru
      _
    %2250 = vsyncpa [#allocation7], 1

</llo_original>
